<compile_context>
chip_gen: v6e
topology: v6e:2x2x1
jax: 0.10.0
libtpu: 0.0.40
codegen_flags: <defaults>
</compile_context>

<pallas_src>
import functools

import jax
import jax.numpy as jnp
from jax.experimental import pallas as pl
from jax.experimental.pallas import tpu as pltpu

EPS = 1e-5
LEAKY_SLOPE = 0.01      # nn.LeakyReLU() default negative_slope

_VMEM = pl.BlockSpec(memory_space=pltpu.MemorySpace.VMEM)


# ------------------------- Pallas kernels -------------------------

def _conv_epilogue_kernel(a_ref, w_ref, b_ref, o_ref, *, bn, act):
    """out = act(BN?(A @ W + bias));  A [M,K] bf16, W [K,N] bf16, bias [1,N] f32."""
    acc = jnp.dot(a_ref[...], w_ref[...], preferred_element_type=jnp.float32)
    acc = acc + b_ref[...]
    if bn:
        # Training-mode BatchNorm over the batch*spatial rows (gamma=1, beta=0,
        # biased variance), centered two-pass for numerical safety.
        m = acc.shape[0]
        mean = jnp.sum(acc, axis=0, keepdims=True) * (1.0 / m)
        cent = acc - mean
        var = jnp.sum(cent * cent, axis=0, keepdims=True) * (1.0 / m)
        acc = cent * jax.lax.rsqrt(var + EPS)
    if act == "leaky":
        acc = jnp.where(acc >= 0, acc, LEAKY_SLOPE * acc)
    elif act == "tanh":
        acc = jnp.tanh(acc)
    o_ref[...] = acc


def _vq_post_kernel(x_ref, cb_ref, wp_ref, bp_ref, o_ref, idx_ref, loss_ref):
    """Nearest-codebook quantization fused with the 1x1 post_conv channel mix."""
    x = x_ref[...]                                     # [N, D] f32
    cb = cb_ref[...]                                   # [K, D] f32
    n_codes = cb.shape[0]
    x2 = jnp.sum(x * x, axis=1, keepdims=True)         # [N, 1]
    c2 = jnp.sum(cb * cb, axis=1, keepdims=True).T     # [1, K]
    xc = jax.lax.dot_general(x, cb, (((1,), (1,)), ((), ())),
                             preferred_element_type=jnp.float32)   # [N, K]
    dist = x2 + c2 - 2.0 * xc                          # squared L2 (same argmin as cdist)
    min_d = jnp.min(dist, axis=1, keepdims=True)       # [N, 1]
    iota = jax.lax.broadcasted_iota(jnp.int32, dist.shape, 1).astype(jnp.float32)
    # first index attaining the minimum (matches torch.argmin tie-breaking)
    idx_f = jnp.min(jnp.where(dist <= min_d, iota, float(n_codes)),
                    axis=1, keepdims=True)             # [N, 1]
    onehot = (iota == idx_f).astype(jnp.float32)       # [N, K]
    q = jnp.dot(onehot, cb, preferred_element_type=jnp.float32)    # [N, D]
    idx_ref[...] = idx_f.astype(jnp.int32)
    diff = x - q
    sq = jnp.sum(jnp.sum(diff * diff, axis=1, keepdims=True), axis=0, keepdims=True)
    loss_ref[...] = sq / float(x.shape[0] * x.shape[1])
    # fused 1x1 post_conv: latent -> first decoder channel count
    o_ref[...] = jnp.dot(q, wp_ref[...], preferred_element_type=jnp.float32) + bp_ref[...]


# ------------------------- wrappers (glue) -------------------------

def conv_block(x_nhwc, wmat, bias, *, ksize, stride, pad, lhs_dilation=(1, 1),
               bn, act):
    """Conv (or dilated-input conv == ConvTranspose) + fused bias/BN/act.

    x_nhwc [B,H,W,Cin]; wmat [Cin*k*k, Cout] bf16 (patches channel-major
    ordering, matching PyTorch weight.reshape(Cout,-1)); bias [1,Cout] f32.
    """
    B = x_nhwc.shape[0]
    patches = jax.lax.conv_general_dilated_patches(
        x_nhwc.astype(jnp.bfloat16),
        filter_shape=(ksize, ksize),
        window_strides=(stride, stride),
        padding=[(pad, pad), (pad, pad)],
        lhs_dilation=lhs_dilation,
        dimension_numbers=("NHWC", "HWIO", "NHWC"),
    )                                                   # [B, Ho, Wo, Cin*k*k]
    _, Ho, Wo, K = patches.shape
    cols = patches.reshape(B * Ho * Wo, K)
    cout = wmat.shape[1]
    out = pl.pallas_call(
        functools.partial(_conv_epilogue_kernel, bn=bn, act=act),
        out_shape=jax.ShapeDtypeStruct((B * Ho * Wo, cout), jnp.float32),
        in_specs=[_VMEM, _VMEM, _VMEM],
        out_specs=_VMEM,
    )(cols, wmat, bias)
    return out.reshape(B, Ho, Wo, cout)


def vq_post(x_nhwc, codebook, post_w, post_b):
    B, H, W, lat = x_nhwc.shape
    x_flat = x_nhwc.reshape(B * H * W, lat)
    dec_ch0 = post_w.shape[1]
    out, idx, loss = pl.pallas_call(
        _vq_post_kernel,
        out_shape=(
            jax.ShapeDtypeStruct((B * H * W, dec_ch0), jnp.float32),
            jax.ShapeDtypeStruct((B * H * W, 1), jnp.int32),
            jax.ShapeDtypeStruct((1, 1), jnp.float32),
        ),
        in_specs=[_VMEM, _VMEM, _VMEM, _VMEM],
        out_specs=(_VMEM, _VMEM, _VMEM),
    )(x_flat, codebook, post_w, post_b)
    # TODO(synk): detach() / straight-through estimator affects gradients only;
    # forward values of both losses are identical and reproduced here.
    loss_sc = loss[0, 0]
    return (out.reshape(B, H, W, dec_ch0), idx.reshape(B, H, W), loss_sc, loss_sc)


# ------------------------- VQVAE model -------------------------

CONFIG = {
    "enc_conv_channels": [3, 8, 16],
    "enc_conv_kernel_size": [3, 3],
    "enc_conv_stride": [2, 2],
    "enc_conv_act": "leaky",
    "latent_dim": 8,
    "codebook_size": 32,
    "dec_tconv_channels": [16, 8, 3],
    "dec_tconv_kernel_size": [4, 4],
    "dec_tconv_stride": [2, 1],
    "dec_tconv_act": "leaky",
}


def init_params(key, config):
    """PyTorch-layout parameters (Conv: [O,I,kh,kw], ConvT: [I,O,kh,kw])."""
    def nrm(k, shape, scale=0.1):
        return scale * jax.random.normal(k, shape, jnp.float32)

    keys = iter(jax.random.split(key, 32))
    params = {}

    enc_ch = config["enc_conv_channels"]
    enc_k = config["enc_conv_kernel_size"]
    params["enc"] = []
    for i in range(len(enc_k)):
        params["enc"].append((nrm(next(keys), (enc_ch[i + 1], enc_ch[i], enc_k[i], enc_k[i])),
                              nrm(next(keys), (enc_ch[i + 1],))))

    params["pre_conv"] = (nrm(next(keys), (config["latent_dim"], enc_ch[-1], 1, 1)),
                          nrm(next(keys), (config["latent_dim"],)))

    params["codebook"] = jax.random.normal(
        next(keys), (config["codebook_size"], config["latent_dim"]), jnp.float32)

    dec_ch = config["dec_tconv_channels"]
    dec_k = config["dec_tconv_kernel_size"]
    params["post_conv"] = (nrm(next(keys), (dec_ch[0], config["latent_dim"], 1, 1)),
                           nrm(next(keys), (dec_ch[0],)))

    params["dec"] = []
    for i in range(len(dec_k) - 1):
        params["dec"].append((nrm(next(keys), (dec_ch[i], dec_ch[i + 1], dec_k[i], dec_k[i])),
                              nrm(next(keys), (dec_ch[i + 1],))))
    last = len(dec_k) - 1
    params["dec"].append((nrm(next(keys), (dec_ch[last], dec_ch[last + 1], 4, 4)),
                          nrm(next(keys), (dec_ch[last + 1],))))
    return params


def prepare_params(params, config):
    """One-time packing into matmul-ready (bf16 weight, f32 bias) matrices."""
    def pack(w_oihw, bias):
        cout = w_oihw.shape[0]
        wmat = jnp.asarray(w_oihw, jnp.float32).reshape(cout, -1).T.astype(jnp.bfloat16)
        return wmat, jnp.asarray(bias, jnp.float32).reshape(1, -1)

    p = {}

    # encoder: all blocks but the last stay as-is; fold the 1x1 pre_conv into
    # the last encoder conv (no nonlinearity between them).
    enc_params = params["enc"]
    enc_packed = [pack(w, b) for (w, b) in enc_params[:-1]]
    w_last, b_last = enc_params[-1]
    wp, bp = params["pre_conv"]
    wp2 = wp[:, :, 0, 0]                                 # [lat, C_enc_last]
    w_fold = jnp.einsum("lc,cdij->ldij", wp2, w_last)    # [lat, Cin, kh, kw]
    b_fold = wp2 @ b_last + bp
    enc_packed.append(pack(w_fold, b_fold))
    p["enc"] = enc_packed

    # quantizer + fused 1x1 post_conv (kept f32: exact argmin / loss)
    p["codebook"] = jnp.asarray(params["codebook"], jnp.float32)
    wq, bq = params["post_conv"]
    p["post_w"] = jnp.asarray(wq[:, :, 0, 0].T, jnp.float32)     # [lat, dec_ch0]
    p["post_b"] = jnp.asarray(bq, jnp.float32).reshape(1, -1)

    # decoder ConvTranspose -> equivalent stride-1 conv on s-dilated input:
    # flip spatially and swap in/out channel dims.
    p["dec"] = []
    for (w, b) in params["dec"]:
        w_eq = jnp.flip(w, axis=(2, 3)).transpose(1, 0, 2, 3)    # [Cout, Cin, kh, kw]
        p["dec"].append(pack(w_eq, b))
    return p


def vqvae_forward(prepped, config, x_nchw):
    out = jnp.transpose(x_nchw, (0, 2, 3, 1))           # NCHW -> NHWC once

    # encoder: Conv(pad=1)+BN+act blocks; last block is Conv only (with the
    # 1x1 pre_conv already folded into its weights).
    enc_k = config["enc_conv_kernel_size"]
    enc_s = config["enc_conv_stride"]
    n_enc = len(enc_k)
    for i, (w, b) in enumerate(prepped["enc"]):
        last = i == n_enc - 1
        out = conv_block(out, w, b, ksize=enc_k[i], stride=enc_s[i], pad=1,
                         bn=not last,
                         act=("none" if last else config["enc_conv_act"]))

    # quantizer (+ fused 1x1 post_conv)
    out, min_enc_idx, codebook_loss, commitment_loss = vq_post(
        out, prepped["codebook"], prepped["post_w"], prepped["post_b"])

    # decoder: ConvT+BN+act blocks; last block ConvT(k=4,s=1)+Tanh.
    # ConvTranspose(stride=s) == stride-1 conv over s-dilated input, pad k-1.
    # TODO(synk): a sub-pixel (phase-decomposed) formulation would avoid the
    # 1/s^2 wasted MXU work on the inserted zeros for large inputs.
    dec_k = config["dec_tconv_kernel_size"]
    dec_s = config["dec_tconv_stride"]
    n_dec = len(dec_k)
    for i, (w, b) in enumerate(prepped["dec"]):
        last = i == n_dec - 1
        k = 4 if last else dec_k[i]
        s = 1 if last else dec_s[i]
        out = conv_block(out, w, b, ksize=k, stride=1, pad=k - 1,
                         lhs_dilation=(s, s),
                         bn=not last,
                         act=("tanh" if last else config["dec_tconv_act"]))

    recon = jnp.transpose(out, (0, 3, 1, 2))             # back to NCHW
    return recon, min_enc_idx, codebook_loss, commitment_loss


if __name__ == "__main__":
    key = jax.random.PRNGKey(0)
    pkey, xkey = jax.random.split(key)
    params = init_params(pkey, CONFIG)
    prepped = prepare_params(params, CONFIG)             # one-time weight packing

    x = jax.random.normal(xkey, (2, 3, 16, 16), jnp.float32)   # NCHW like PyTorch

    fwd = jax.jit(lambda p, xx: vqvae_forward(p, CONFIG, xx))
    recon, min_enc_idx, codebook_loss, commitment_loss = fwd(prepped, x)
    jax.block_until_ready((recon, min_enc_idx, codebook_loss, commitment_loss))

    # 16 -> 8 -> 4 (encoder), 4 -> 10 -> 13 (decoder with this config)
    assert recon.shape == (2, 3, 13, 13), recon.shape
    assert min_enc_idx.shape == (2, 4, 4), min_enc_idx.shape
    assert codebook_loss.shape == () and commitment_loss.shape == ()
    assert bool(jnp.isfinite(recon).all()) and bool(jnp.isfinite(codebook_loss))

    print("KERNEL_OK")
</pallas_src>

<mosaic_0001>
module attributes {stable_mosaic.version = 11 : i64} {
  func.func @_conv_epilogue_kernel(%arg0: memref<128x27xbf16, #tpu.memory_space<vmem>>, %arg1: memref<27x8xbf16, #tpu.memory_space<vmem>>, %arg2: memref<1x8xf32, #tpu.memory_space<vmem>>, %arg3: memref<128x8xf32, #tpu.memory_space<vmem>>) attributes {dimension_semantics = [], scalar_prefetch = 0 : i64, scratch_operands = 0 : i64, tpu.core_type = #tpu.core_type<tc>} {
    %c0 = arith.constant 0 : index
    %c0_0 = arith.constant 0 : index
    %0 = vector.load %arg0[%c0, %c0_0] : memref<128x27xbf16, #tpu.memory_space<vmem>>, vector<128x27xbf16>
    %c0_1 = arith.constant 0 : index
    %c0_2 = arith.constant 0 : index
    %1 = vector.load %arg1[%c0_1, %c0_2] : memref<27x8xbf16, #tpu.memory_space<vmem>>, vector<27x8xbf16>
    %cst = arith.constant dense<0.000000e+00> : vector<128x8xf32>
    %2 = tpu.matmul %0, %1, %cst {dimension_numbers = #tpu.dot_dimension_numbers<[1], [0], [0], [1], [0, 0, 1, 1], [], []>} : vector<128x27xbf16>, vector<27x8xbf16>, vector<128x8xf32> -> vector<128x8xf32>
    %c0_3 = arith.constant 0 : index
    %c0_4 = arith.constant 0 : index
    %3 = vector.load %arg2[%c0_3, %c0_4] : memref<1x8xf32, #tpu.memory_space<vmem>>, vector<1x8xf32>
    %4 = vector.broadcast %3 : vector<1x8xf32> to vector<128x8xf32>
    %5 = arith.addf %2, %4 : vector<128x8xf32>
    %cst_5 = arith.constant dense<0.000000e+00> : vector<8xf32>
    %6 = vector.multi_reduction <add>, %5, %cst_5 [0] : vector<128x8xf32> to vector<8xf32>
    %7 = vector.shape_cast %6 : vector<8xf32> to vector<1x8xf32>
    %cst_6 = arith.constant 7.812500e-03 : f32
    %8 = vector.broadcast %cst_6 : f32 to vector<1x8xf32>
    %9 = arith.mulf %7, %8 : vector<1x8xf32>
    %10 = vector.broadcast %9 : vector<1x8xf32> to vector<128x8xf32>
    %11 = arith.subf %5, %10 : vector<128x8xf32>
    %12 = arith.mulf %11, %11 : vector<128x8xf32>
    %cst_7 = arith.constant dense<0.000000e+00> : vector<8xf32>
    %13 = vector.multi_reduction <add>, %12, %cst_7 [0] : vector<128x8xf32> to vector<8xf32>
    %14 = vector.shape_cast %13 : vector<8xf32> to vector<1x8xf32>
    %cst_8 = arith.constant 7.812500e-03 : f32
    %15 = vector.broadcast %cst_8 : f32 to vector<1x8xf32>
    %16 = arith.mulf %14, %15 : vector<1x8xf32>
    %cst_9 = arith.constant 9.99999974E-6 : f32
    %17 = vector.broadcast %cst_9 : f32 to vector<1x8xf32>
    %18 = arith.addf %16, %17 : vector<1x8xf32>
    %19 = math.rsqrt %18 : vector<1x8xf32>
    %20 = vector.broadcast %19 : vector<1x8xf32> to vector<128x8xf32>
    %21 = arith.mulf %11, %20 : vector<128x8xf32>
    %cst_10 = arith.constant 0.000000e+00 : f32
    %22 = vector.broadcast %cst_10 : f32 to vector<128x8xf32>
    %23 = arith.cmpf oge, %21, %22 : vector<128x8xf32>
    %cst_11 = arith.constant 0.00999999977 : f32
    %24 = vector.broadcast %cst_11 : f32 to vector<128x8xf32>
    %25 = arith.mulf %24, %21 : vector<128x8xf32>
    %26 = arith.select %23, %21, %25 : vector<128x8xi1>, vector<128x8xf32>
    %c0_12 = arith.constant 0 : index
    %c0_13 = arith.constant 0 : index
    %27 = vector.load %arg3[%c0_12, %c0_13] : memref<128x8xf32, #tpu.memory_space<vmem>>, vector<128x8xf32>
    tpu.vector_store %arg3[%c0_12, %c0_13], %26 {strides = array<i32>} : memref<128x8xf32, #tpu.memory_space<vmem>>, vector<128x8xf32>,
    return
  }
}

module attributes {stable_mosaic.version = 11 : i64} {
  func.func @_conv_epilogue_kernel(%arg0: memref<32x72xbf16, #tpu.memory_space<vmem>>, %arg1: memref<72x8xbf16, #tpu.memory_space<vmem>>, %arg2: memref<1x8xf32, #tpu.memory_space<vmem>>, %arg3: memref<32x8xf32, #tpu.memory_space<vmem>>) attributes {dimension_semantics = [], scalar_prefetch = 0 : i64, scratch_operands = 0 : i64, tpu.core_type = #tpu.core_type<tc>} {
    %c0 = arith.constant 0 : index
    %c0_0 = arith.constant 0 : index
    %0 = vector.load %arg0[%c0, %c0_0] : memref<32x72xbf16, #tpu.memory_space<vmem>>, vector<32x72xbf16>
    %c0_1 = arith.constant 0 : index
    %c0_2 = arith.constant 0 : index
    %1 = vector.load %arg1[%c0_1, %c0_2] : memref<72x8xbf16, #tpu.memory_space<vmem>>, vector<72x8xbf16>
    %cst = arith.constant dense<0.000000e+00> : vector<32x8xf32>
    %2 = tpu.matmul %0, %1, %cst {dimension_numbers = #tpu.dot_dimension_numbers<[1], [0], [0], [1], [0, 0, 1, 1], [], []>} : vector<32x72xbf16>, vector<72x8xbf16>, vector<32x8xf32> -> vector<32x8xf32>
    %c0_3 = arith.constant 0 : index
    %c0_4 = arith.constant 0 : index
    %3 = vector.load %arg2[%c0_3, %c0_4] : memref<1x8xf32, #tpu.memory_space<vmem>>, vector<1x8xf32>
    %4 = vector.broadcast %3 : vector<1x8xf32> to vector<32x8xf32>
    %5 = arith.addf %2, %4 : vector<32x8xf32>
    %c0_5 = arith.constant 0 : index
    %c0_6 = arith.constant 0 : index
    %6 = vector.load %arg3[%c0_5, %c0_6] : memref<32x8xf32, #tpu.memory_space<vmem>>, vector<32x8xf32>
    tpu.vector_store %arg3[%c0_5, %c0_6], %5 {strides = array<i32>} : memref<32x8xf32, #tpu.memory_space<vmem>>, vector<32x8xf32>,
    return
  }
}

module attributes {stable_mosaic.version = 11 : i64} {
  func.func @_vq_post_kernel(%arg0: memref<32x8xf32, #tpu.memory_space<vmem>>, %arg1: memref<32x8xf32, #tpu.memory_space<vmem>>, %arg2: memref<8x16xf32, #tpu.memory_space<vmem>>, %arg3: memref<1x16xf32, #tpu.memory_space<vmem>>, %arg4: memref<32x16xf32, #tpu.memory_space<vmem>>, %arg5: memref<32x1xi32, #tpu.memory_space<vmem>>, %arg6: memref<1x1xf32, #tpu.memory_space<vmem>>) attributes {dimension_semantics = [], scalar_prefetch = 0 : i64, scratch_operands = 0 : i64, tpu.core_type = #tpu.core_type<tc>} {
    %c0 = arith.constant 0 : index
    %c0_0 = arith.constant 0 : index
    %0 = vector.load %arg0[%c0, %c0_0] : memref<32x8xf32, #tpu.memory_space<vmem>>, vector<32x8xf32>
    %c0_1 = arith.constant 0 : index
    %c0_2 = arith.constant 0 : index
    %1 = vector.load %arg1[%c0_1, %c0_2] : memref<32x8xf32, #tpu.memory_space<vmem>>, vector<32x8xf32>
    %2 = arith.mulf %0, %0 : vector<32x8xf32>
    %cst = arith.constant dense<0.000000e+00> : vector<32xf32>
    %3 = vector.multi_reduction <add>, %2, %cst [1] : vector<32x8xf32> to vector<32xf32>
    %4 = vector.shape_cast %3 : vector<32xf32> to vector<32x1xf32>
    %5 = arith.mulf %1, %1 : vector<32x8xf32>
    %cst_3 = arith.constant dense<0.000000e+00> : vector<32xf32>
    %6 = vector.multi_reduction <add>, %5, %cst_3 [1] : vector<32x8xf32> to vector<32xf32>
    %7 = vector.shape_cast %6 : vector<32xf32> to vector<32x1xf32>
    %8 = tpu.transpose %7, [1, 0] : vector<32x1xf32> -> vector<1x32xf32>
    %cst_4 = arith.constant dense<0.000000e+00> : vector<32x32xf32>
    %9 = tpu.matmul %0, %1, %cst_4 {dimension_numbers = #tpu.dot_dimension_numbers<[1], [1], [0], [0], [0, 0, 1, 0], [], []>} : vector<32x8xf32>, vector<32x8xf32>, vector<32x32xf32> -> vector<32x32xf32>
    %10 = vector.broadcast %4 : vector<32x1xf32> to vector<32x32xf32>
    %11 = vector.broadcast %8 : vector<1x32xf32> to vector<32x32xf32>
    %12 = arith.addf %10, %11 : vector<32x32xf32>
    %cst_5 = arith.constant 2.000000e+00 : f32
    %13 = vector.broadcast %cst_5 : f32 to vector<32x32xf32>
    %14 = arith.mulf %13, %9 : vector<32x32xf32>
    %15 = arith.subf %12, %14 : vector<32x32xf32>
    %cst_6 = arith.constant dense<0x7F800000> : vector<32xf32>
    %16 = vector.multi_reduction <minimumf>, %15, %cst_6 [1] : vector<32x32xf32> to vector<32xf32>
    %17 = vector.shape_cast %16 : vector<32xf32> to vector<32x1xf32>
    %18 = tpu.iota {dimensions = array<i32: 1>} : vector<32x32xi32>
    %19 = arith.sitofp %18 : vector<32x32xi32> to vector<32x32xf32>
    %20 = vector.broadcast %17 : vector<32x1xf32> to vector<32x32xf32>
    %21 = arith.cmpf ole, %15, %20 : vector<32x32xf32>
    %cst_7 = arith.constant 3.200000e+01 : f32
    %22 = vector.broadcast %cst_7 : f32 to vector<32x32xf32>
    %23 = arith.select %21, %19, %22 : vector<32x32xi1>, vector<32x32xf32>
    %cst_8 = arith.constant dense<0x7F800000> : vector<32xf32>
    %24 = vector.multi_reduction <minimumf>, %23, %cst_8 [1] : vector<32x32xf32> to vector<32xf32>
    %25 = vector.shape_cast %24 : vector<32xf32> to vector<32x1xf32>
    %26 = vector.broadcast %25 : vector<32x1xf32> to vector<32x32xf32>
    %27 = arith.cmpf oeq, %19, %26 : vector<32x32xf32>
    %28 = arith.extui %27 : vector<32x32xi1> to vector<32x32xi32>
    %29 = arith.sitofp %28 : vector<32x32xi32> to vector<32x32xf32>
    %cst_9 = arith.constant dense<0.000000e+00> : vector<32x8xf32>
    %30 = tpu.matmul %29, %1, %cst_9 {dimension_numbers = #tpu.dot_dimension_numbers<[1], [0], [0], [1], [0, 0, 1, 1], [], []>} : vector<32x32xf32>, vector<32x8xf32>, vector<32x8xf32> -> vector<32x8xf32>
    %31 = arith.fptosi %25 : vector<32x1xf32> to vector<32x1xi32>
    %c0_10 = arith.constant 0 : index
    %c0_11 = arith.constant 0 : index
    %32 = vector.load %arg5[%c0_10, %c0_11] : memref<32x1xi32, #tpu.memory_space<vmem>>, vector<32x1xi32>
    tpu.vector_store %arg5[%c0_10, %c0_11], %31 {strides = array<i32>} : memref<32x1xi32, #tpu.memory_space<vmem>>, vector<32x1xi32>,
    %33 = arith.subf %0, %30 : vector<32x8xf32>
    %34 = arith.mulf %33, %33 : vector<32x8xf32>
    %cst_12 = arith.constant dense<0.000000e+00> : vector<32xf32>
    %35 = vector.multi_reduction <add>, %34, %cst_12 [1] : vector<32x8xf32> to vector<32xf32>
    %36 = vector.shape_cast %35 : vector<32xf32> to vector<32x1xf32>
    %cst_13 = arith.constant dense<0.000000e+00> : vector<1xf32>
    %37 = vector.multi_reduction <add>, %36, %cst_13 [0] : vector<32x1xf32> to vector<1xf32>
    %38 = vector.shape_cast %37 : vector<1xf32> to vector<1x1xf32>
    %cst_14 = arith.constant 2.560000e+02 : f32
    %39 = vector.broadcast %cst_14 : f32 to vector<1x1xf32>
    %40 = arith.divf %38, %39 : vector<1x1xf32>
    %c0_15 = arith.constant 0 : index
    %c0_16 = arith.constant 0 : index
    %41 = vector.load %arg6[%c0_15, %c0_16] : memref<1x1xf32, #tpu.memory_space<vmem>>, vector<1x1xf32>
    tpu.vector_store %arg6[%c0_15, %c0_16], %40 {strides = array<i32>} : memref<1x1xf32, #tpu.memory_space<vmem>>, vector<1x1xf32>,
    %c0_17 = arith.constant 0 : index
    %c0_18 = arith.constant 0 : index
    %42 = vector.load %arg2[%c0_17, %c0_18] : memref<8x16xf32, #tpu.memory_space<vmem>>, vector<8x16xf32>
    %cst_19 = arith.constant dense<0.000000e+00> : vector<32x16xf32>
    %43 = tpu.matmul %30, %42, %cst_19 {dimension_numbers = #tpu.dot_dimension_numbers<[1], [0], [0], [1], [0, 0, 1, 1], [], []>} : vector<32x8xf32>, vector<8x16xf32>, vector<32x16xf32> -> vector<32x16xf32>
    %c0_20 = arith.constant 0 : index
    %c0_21 = arith.constant 0 : index
    %44 = vector.load %arg3[%c0_20, %c0_21] : memref<1x16xf32, #tpu.memory_space<vmem>>, vector<1x16xf32>
    %45 = vector.broadcast %44 : vector<1x16xf32> to vector<32x16xf32>
    %46 = arith.addf %43, %45 : vector<32x16xf32>
    %c0_22 = arith.constant 0 : index
    %c0_23 = arith.constant 0 : index
    %47 = vector.load %arg4[%c0_22, %c0_23] : memref<32x16xf32, #tpu.memory_space<vmem>>, vector<32x16xf32>
    tpu.vector_store %arg4[%c0_22, %c0_23], %46 {strides = array<i32>} : memref<32x16xf32, #tpu.memory_space<vmem>>, vector<32x16xf32>,
    return
  }
}

module attributes {stable_mosaic.version = 11 : i64} {
  func.func @_conv_epilogue_kernel(%arg0: memref<200x256xbf16, #tpu.memory_space<vmem>>, %arg1: memref<256x8xbf16, #tpu.memory_space<vmem>>, %arg2: memref<1x8xf32, #tpu.memory_space<vmem>>, %arg3: memref<200x8xf32, #tpu.memory_space<vmem>>) attributes {dimension_semantics = [], scalar_prefetch = 0 : i64, scratch_operands = 0 : i64, tpu.core_type = #tpu.core_type<tc>} {
    %c0 = arith.constant 0 : index
    %c0_0 = arith.constant 0 : index
    %0 = vector.load %arg0[%c0, %c0_0] : memref<200x256xbf16, #tpu.memory_space<vmem>>, vector<200x256xbf16>
    %c0_1 = arith.constant 0 : index
    %c0_2 = arith.constant 0 : index
    %1 = vector.load %arg1[%c0_1, %c0_2] : memref<256x8xbf16, #tpu.memory_space<vmem>>, vector<256x8xbf16>
    %cst = arith.constant dense<0.000000e+00> : vector<200x8xf32>
    %2 = tpu.matmul %0, %1, %cst {dimension_numbers = #tpu.dot_dimension_numbers<[1], [0], [0], [1], [0, 0, 1, 1], [], []>} : vector<200x256xbf16>, vector<256x8xbf16>, vector<200x8xf32> -> vector<200x8xf32>
    %c0_3 = arith.constant 0 : index
    %c0_4 = arith.constant 0 : index
    %3 = vector.load %arg2[%c0_3, %c0_4] : memref<1x8xf32, #tpu.memory_space<vmem>>, vector<1x8xf32>
    %4 = vector.broadcast %3 : vector<1x8xf32> to vector<200x8xf32>
    %5 = arith.addf %2, %4 : vector<200x8xf32>
    %cst_5 = arith.constant dense<0.000000e+00> : vector<8xf32>
    %6 = vector.multi_reduction <add>, %5, %cst_5 [0] : vector<200x8xf32> to vector<8xf32>
    %7 = vector.shape_cast %6 : vector<8xf32> to vector<1x8xf32>
    %cst_6 = arith.constant 5.000000e-03 : f32
    %8 = vector.broadcast %cst_6 : f32 to vector<1x8xf32>
    %9 = arith.mulf %7, %8 : vector<1x8xf32>
    %10 = vector.broadcast %9 : vector<1x8xf32> to vector<200x8xf32>
    %11 = arith.subf %5, %10 : vector<200x8xf32>
    %12 = arith.mulf %11, %11 : vector<200x8xf32>
    %cst_7 = arith.constant dense<0.000000e+00> : vector<8xf32>
    %13 = vector.multi_reduction <add>, %12, %cst_7 [0] : vector<200x8xf32> to vector<8xf32>
    %14 = vector.shape_cast %13 : vector<8xf32> to vector<1x8xf32>
    %cst_8 = arith.constant 5.000000e-03 : f32
    %15 = vector.broadcast %cst_8 : f32 to vector<1x8xf32>
    %16 = arith.mulf %14, %15 : vector<1x8xf32>
    %cst_9 = arith.constant 9.99999974E-6 : f32
    %17 = vector.broadcast %cst_9 : f32 to vector<1x8xf32>
    %18 = arith.addf %16, %17 : vector<1x8xf32>
    %19 = math.rsqrt %18 : vector<1x8xf32>
    %20 = vector.broadcast %19 : vector<1x8xf32> to vector<200x8xf32>
    %21 = arith.mulf %11, %20 : vector<200x8xf32>
    %cst_10 = arith.constant 0.000000e+00 : f32
    %22 = vector.broadcast %cst_10 : f32 to vector<200x8xf32>
    %23 = arith.cmpf oge, %21, %22 : vector<200x8xf32>
    %cst_11 = arith.constant 0.00999999977 : f32
    %24 = vector.broadcast %cst_11 : f32 to vector<200x8xf32>
    %25 = arith.mulf %24, %21 : vector<200x8xf32>
    %26 = arith.select %23, %21, %25 : vector<200x8xi1>, vector<200x8xf32>
    %c0_12 = arith.constant 0 : index
    %c0_13 = arith.constant 0 : index
    %27 = vector.load %arg3[%c0_12, %c0_13] : memref<200x8xf32, #tpu.memory_space<vmem>>, vector<200x8xf32>
    tpu.vector_store %arg3[%c0_12, %c0_13], %26 {strides = array<i32>} : memref<200x8xf32, #tpu.memory_space<vmem>>, vector<200x8xf32>,
    return
  }
}

module attributes {stable_mosaic.version = 11 : i64} {
  func.func @_conv_epilogue_kernel(%arg0: memref<338x128xbf16, #tpu.memory_space<vmem>>, %arg1: memref<128x3xbf16, #tpu.memory_space<vmem>>, %arg2: memref<1x3xf32, #tpu.memory_space<vmem>>, %arg3: memref<338x3xf32, #tpu.memory_space<vmem>>) attributes {dimension_semantics = [], scalar_prefetch = 0 : i64, scratch_operands = 0 : i64, tpu.core_type = #tpu.core_type<tc>} {
    %c0 = arith.constant 0 : index
    %c0_0 = arith.constant 0 : index
    %0 = vector.load %arg0[%c0, %c0_0] : memref<338x128xbf16, #tpu.memory_space<vmem>>, vector<338x128xbf16>
    %c0_1 = arith.constant 0 : index
    %c0_2 = arith.constant 0 : index
    %1 = vector.load %arg1[%c0_1, %c0_2] : memref<128x3xbf16, #tpu.memory_space<vmem>>, vector<128x3xbf16>
    %cst = arith.constant dense<0.000000e+00> : vector<338x3xf32>
    %2 = tpu.matmul %0, %1, %cst {dimension_numbers = #tpu.dot_dimension_numbers<[1], [0], [0], [1], [0, 0, 1, 1], [], []>} : vector<338x128xbf16>, vector<128x3xbf16>, vector<338x3xf32> -> vector<338x3xf32>
    %c0_3 = arith.constant 0 : index
    %c0_4 = arith.constant 0 : index
    %3 = vector.load %arg2[%c0_3, %c0_4] : memref<1x3xf32, #tpu.memory_space<vmem>>, vector<1x3xf32>
    %4 = vector.broadcast %3 : vector<1x3xf32> to vector<338x3xf32>
    %5 = arith.addf %2, %4 : vector<338x3xf32>
    %6 = math.tanh %5 : vector<338x3xf32>
    %c0_5 = arith.constant 0 : index
    %c0_6 = arith.constant 0 : index
    %7 = vector.load %arg3[%c0_5, %c0_6] : memref<338x3xf32, #tpu.memory_space<vmem>>, vector<338x3xf32>
    tpu.vector_store %arg3[%c0_5, %c0_6], %6 {strides = array<i32>} : memref<338x3xf32, #tpu.memory_space<vmem>>, vector<338x3xf32>,
    return
  }
}

</mosaic_0001>

<llo_original>
// kernel: _lambda_.5
$region0: #{_lambda_.5}
  #allocation0 [shape = 'u32[]', space=smem, size = 0x4, offset = 0x4, fixed_abs, tag = 'smem constant byte address 0x4 - core index']
  #allocation1 [shape = 'u32[144,128]{1,0:T(1,128)}', space=vmem, size = 0x12000, scoped, tag = 'internal scratch']
  %s0 = inlined_call_operand.vmem [shape: bf16[128,27], index: 0, kind: input, shape index: {}]
  %s1 = inlined_call_operand.vmem [shape: bf16[27,8], index: 1, kind: input, shape index: {}]
  %s2 = inlined_call_operand.vmem [shape: f32[1,8], index: 2, kind: input, shape index: {}]
  %s3 = inlined_call_operand.vmem [shape: f32[128,8], index: 3, kind: output, shape index: {}]
  %s4 = sld [smem:[#allocation0]]
  $region22: #{_lambda_.5} parent=0
    _
  %s6 = ssub.s32 1, %s4
  %s7 = scalar_select 0, %s6, %s4
  // Predicated region
  $region2: #{_lambda_.5} parent=0 // pred_check
    _
  $region3: #{_lambda_.5} parent=0 // pred_check_branch
    %9 = sbr.rel (0) target = $region5
  $region4: #{_lambda_.5} parent=0 // pred_region
    _
  $region5: #{_lambda_.5} parent=0 // pred_fallthru
    _
  // Predicated region
  $region6: #{_lambda_.5} parent=0 // pred_check
    _
  $region7: #{_lambda_.5} parent=0 // pred_check_branch
    %11 = sbr.rel (0) target = $region9
  $region8: #{_lambda_.5} parent=0 // pred_region
    _
  $region9: #{_lambda_.5} parent=0 // pred_fallthru
    _
  // Predicated region
  $region10: #{_lambda_.5} parent=0 // pred_check
    _
  $region11: #{_lambda_.5} parent=0 // pred_check_branch
    %13 = sbr.rel (0) target = $region13
  $region12: #{_lambda_.5} parent=0 // pred_region
    _
  $region13: #{_lambda_.5} parent=0 // pred_fallthru
    _
  %v15 = vld [vmem:[%s0] sm:$0xf]
  %v16 = vld [vmem:[%s0 + $0x4] sm:$0xf]
  %v17 = vld [vmem:[%s0 + $0x8] sm:$0xf]
  %v18 = vld [vmem:[%s0 + $0xc] sm:$0xf]
  %v19 = vld [vmem:[%s0 + $0x10] sm:$0xf]
  %v20 = vld [vmem:[%s0 + $0x14] sm:$0xf]
  %v21 = vld [vmem:[%s0 + $0x18] sm:$0xf]
  %v22 = vld [vmem:[%s0 + $0x1c] sm:$0xf]
  %v23 = vld [vmem:[%s0 + $0x20] sm:$0xf]
  %v24 = vld [vmem:[%s0 + $0x24] sm:$0xf]
  %v25 = vld [vmem:[%s0 + $0x28] sm:$0xf]
  %v26 = vld [vmem:[%s0 + $0x2c] sm:$0xf]
  %v27 = vld [vmem:[%s0 + $0x30] sm:$0xf]
  %v28 = vld [vmem:[%s0 + $0x34] sm:$0xf]
  %v29 = vld [vmem:[%s0 + $0x38] sm:$0xf]
  %v30 = vld [vmem:[%s0 + $0x3c] sm:$0xf]
  %v31 = vld [vmem:[%s1] sm:$0xf]
  %v32 = vld [vmem:[%s1 + $0x4] sm:$0xf]
  %v33 = vld [vmem:[%s1 + $0x8] sm:$0xf]
  %v34 = vld [vmem:[%s1 + $0xc] sm:$0x3]
  %v35 = vld [vmem:[%s2] sm:$0x1]
  %v37 = vlaneseq
  %v38 = vshrl.u32 %v37, 7
  %v39 = vsub.s32 0, %v38
  %v40 = vrot.slane %v35, %v39
  %v58 = vunpack.c.l.b16 %v15
  %v59 = vunpack.c.l.b16 %v16
  %v60 = vunpack.c.l.b16 %v17
  %v61 = vunpack.c.l.b16 %v18
  %v62 = vunpack.c.l.b16 %v19
  %v63 = vunpack.c.l.b16 %v20
  %v64 = vunpack.c.l.b16 %v21
  %v65 = vunpack.c.l.b16 %v22
  %v66 = vunpack.c.l.b16 %v23
  %v67 = vunpack.c.l.b16 %v24
  %v68 = vunpack.c.l.b16 %v25
  %v69 = vunpack.c.l.b16 %v26
  %v70 = vunpack.c.l.b16 %v27
  %v71 = vunpack.c.l.b16 %v28
  %v72 = vunpack.c.l.b16 %v29
  %v73 = vunpack.c.l.b16 %v30
  %v74 = vpack.c.b16 %v59, %v58
  %v75 = vpack.c.b16 %v61, %v60
  %v76 = vpack.c.b16 %v63, %v62
  %v77 = vpack.c.b16 %v65, %v64
  %v78 = vpack.c.b16 %v67, %v66
  %v79 = vpack.c.b16 %v69, %v68
  %v80 = vpack.c.b16 %v71, %v70
  %v81 = vpack.c.b16 %v73, %v72
  %v86 = vunpack.c.l.b16 %v31
  %v87 = vunpack.c.l.b16 %v32
  %v88 = vunpack.c.l.b16 %v33
  %v89 = vunpack.c.l.b16 %v34
  %v90 = vpack.c.b16 %v87, %v86
  %v91 = vpack.c.b16 %v89, %v88
  %vm93 = vcmask 220160
  %v95 = vsel %vm93, %v74, 0
  %v98 = vsel %vm93, %v75, 0
  %v101 = vsel %vm93, %v76, 0
  %v104 = vsel %vm93, %v77, 0
  %v107 = vsel %vm93, %v78, 0
  %v110 = vsel %vm93, %v79, 0
  %v113 = vsel %vm93, %v80, 0
  %v116 = vsel %vm93, %v81, 0
  %vm118 = vcmask 1044480
  %vm119 = vcmask 1045504
  %v120 = vsel %vm118, 4294967295, 65535
  %v121 = vsel %vm119, %v120, 0
  %v123 = vand.u32 %v91, %v121
  %125 = vmatprep.subr.bf16.mxu0 0
  %126 = vmatpush1.bf16.msra.mxu0 0
  %127 = vmatprep.subr.bf16.mxu0 0
  %128 = vmatpush1.bf16.msra.mxu0 0
  %129 = vmatprep.subr.bf16.mxu0 0
  %130 = vmatpush1.bf16.msra.mxu0 0
  %131 = vmatprep.subr.bf16.mxu0 0
  %132 = vmatpush1.bf16.msra.mxu0 0
  %133 = vmatprep.subr.bf16.mxu0 0
  %134 = vmatpush1.bf16.msra.mxu0 0
  %135 = vmatprep.subr.bf16.mxu0 0
  %136 = vmatpush1.bf16.msra.mxu0 0
  %137 = vmatprep.subr.bf16.mxu0 0
  %138 = vmatpush1.bf16.msra.mxu0 %v123
  %139 = vmatprep.subr.bf16.mxu0 0
  %140 = vmatpush1.bf16.msra.mxu0 %v90
  %141 = vmatprep.subr.bf16.mxu0 0
  %142 = vmatpush2.bf16.msra.mxu0 0
  %143 = vmatprep.subr.bf16.mxu0 0
  %144 = vmatpush2.bf16.msra.mxu0 0
  %145 = vmatprep.subr.bf16.mxu0 0
  %146 = vmatpush2.bf16.msra.mxu0 0
  %147 = vmatprep.subr.bf16.mxu0 0
  %148 = vmatpush2.bf16.msra.mxu0 0
  %149 = vmatprep.subr.bf16.mxu0 0
  %150 = vmatpush2.bf16.msra.mxu0 0
  %151 = vmatprep.subr.bf16.mxu0 0
  %152 = vmatpush2.bf16.msra.mxu0 0
  %153 = vmatprep.subr.bf16.mxu0 0
  %154 = vmatpush2.bf16.msra.mxu0 0
  %155 = vmatprep.subr.bf16.mxu0 0
  %156 = vmatpush2.bf16.msra.mxu0 0
  %157 = vmatprep.mubr.bf16.mxu0 0
  %158 = vmatmul.mubr.bf16.gmra.mxu0 %v95
  %v159 = vpop.f32.mrf.mxu0
  %v160 = vadd.f32 %v40, %v159
  %v161 = vpop.f32.mrf.mxu0
  %v162 = vpop.f32.mrf.mxu0
  %v163 = vadd.f32 %v40, %v162
  %v164 = vpop.f32.mrf.mxu0
  %165 = vmatprep.mubr.bf16.mxu0 0
  %166 = vmatmul.mubr.bf16.gmra.mxu0 %v98
  %v167 = vpop.f32.mrf.mxu0
  %v168 = vadd.f32 %v40, %v167
  %v169 = vpop.f32.mrf.mxu0
  %v170 = vpop.f32.mrf.mxu0
  %v171 = vadd.f32 %v40, %v170
  %v172 = vpop.f32.mrf.mxu0
  %173 = vmatprep.mubr.bf16.mxu0 0
  %174 = vmatmul.mubr.bf16.gmra.mxu0 %v101
  %v175 = vpop.f32.mrf.mxu0
  %v176 = vadd.f32 %v40, %v175
  %v177 = vpop.f32.mrf.mxu0
  %v178 = vpop.f32.mrf.mxu0
  %v179 = vadd.f32 %v40, %v178
  %v180 = vpop.f32.mrf.mxu0
  %181 = vmatprep.mubr.bf16.mxu0 0
  %182 = vmatmul.mubr.bf16.gmra.mxu0 %v104
  %v183 = vpop.f32.mrf.mxu0
  %v184 = vadd.f32 %v40, %v183
  %v185 = vpop.f32.mrf.mxu0
  %v186 = vpop.f32.mrf.mxu0
  %v187 = vadd.f32 %v40, %v186
  %v188 = vpop.f32.mrf.mxu0
  %189 = vmatprep.mubr.bf16.mxu0 0
  %190 = vmatmul.mubr.bf16.gmra.mxu0 %v107
  %v191 = vpop.f32.mrf.mxu0
  %v192 = vadd.f32 %v40, %v191
  %v193 = vpop.f32.mrf.mxu0
  %v194 = vpop.f32.mrf.mxu0
  %v195 = vadd.f32 %v40, %v194
  %v196 = vpop.f32.mrf.mxu0
  %197 = vmatprep.mubr.bf16.mxu0 0
  %198 = vmatmul.mubr.bf16.gmra.mxu0 %v110
  %v199 = vpop.f32.mrf.mxu0
  %v200 = vadd.f32 %v40, %v199
  %v201 = vpop.f32.mrf.mxu0
  %v202 = vpop.f32.mrf.mxu0
  %v203 = vadd.f32 %v40, %v202
  %v204 = vpop.f32.mrf.mxu0
  %205 = vmatprep.mubr.bf16.mxu0 0
  %206 = vmatmul.mubr.bf16.gmra.mxu0 %v113
  %v207 = vpop.f32.mrf.mxu0
  %v208 = vadd.f32 %v40, %v207
  %v209 = vpop.f32.mrf.mxu0
  %v210 = vpop.f32.mrf.mxu0
  %v211 = vadd.f32 %v40, %v210
  %v212 = vpop.f32.mrf.mxu0
  %213 = vmatprep.mubr.bf16.mxu0 0
  %214 = vmatmul.mubr.bf16.gmra.mxu0 %v116
  %v215 = vpop.f32.mrf.mxu0
  %v216 = vadd.f32 %v40, %v215
  %v217 = vpop.f32.mrf.mxu0
  %v218 = vpop.f32.mrf.mxu0
  %v219 = vadd.f32 %v40, %v218
  %v220 = vpop.f32.mrf.mxu0
  %221 = vdwg.mxu0
  %vm222 = vcmask 64512
  %v223 = vsel %vm222, %v160, 0.0
  %v224 = vsel %vm222, %v163, 0.0
  %v225 = vadd.f32 %v223, %v224
  %v226 = vsel %vm222, %v168, 0.0
  %v227 = vadd.f32 %v225, %v226
  %v228 = vsel %vm222, %v171, 0.0
  %v229 = vadd.f32 %v227, %v228
  %v230 = vsel %vm222, %v176, 0.0
  %v231 = vadd.f32 %v229, %v230
  %v232 = vsel %vm222, %v179, 0.0
  %v233 = vadd.f32 %v231, %v232
  %v234 = vsel %vm222, %v184, 0.0
  %v235 = vadd.f32 %v233, %v234
  %v236 = vsel %vm222, %v187, 0.0
  %v237 = vadd.f32 %v235, %v236
  %v238 = vsel %vm222, %v192, 0.0
  %v239 = vadd.f32 %v237, %v238
  %v240 = vsel %vm222, %v195, 0.0
  %v241 = vadd.f32 %v239, %v240
  %v242 = vsel %vm222, %v200, 0.0
  %v243 = vadd.f32 %v241, %v242
  %v244 = vsel %vm222, %v203, 0.0
  %v245 = vadd.f32 %v243, %v244
  %v246 = vsel %vm222, %v208, 0.0
  %v247 = vadd.f32 %v245, %v246
  %v248 = vsel %vm222, %v211, 0.0
  %v249 = vadd.f32 %v247, %v248
  %v250 = vsel %vm222, %v216, 0.0
  %v251 = vadd.f32 %v249, %v250
  %v252 = vsel %vm222, %v219, 0.0
  %v253 = vadd.f32 %v251, %v252
  %v254 = vrot.slane %v253, 4
  %v255 = vadd.f32 %v253, %v254
  %v256 = vrot.slane %v255, 2
  %v257 = vadd.f32 %v255, %v256
  %v258 = vrot.slane %v257, 1
  %v259 = vadd.f32 %v257, %v258
  %v260 = vmul.f32 %v259, 0.0078125
  %v261 = vsub.f32 %v160, %v260
  %v262 = vsub.f32 %v163, %v260
  %v263 = vsub.f32 %v168, %v260
  %v264 = vsub.f32 %v171, %v260
  %v265 = vsub.f32 %v176, %v260
  %v266 = vsub.f32 %v179, %v260
  %v267 = vsub.f32 %v184, %v260
  %v268 = vsub.f32 %v187, %v260
  %v269 = vsub.f32 %v192, %v260
  %v270 = vsub.f32 %v195, %v260
  %v271 = vsub.f32 %v200, %v260
  %v272 = vsub.f32 %v203, %v260
  %v273 = vsub.f32 %v208, %v260
  %v274 = vsub.f32 %v211, %v260
  %v275 = vsub.f32 %v216, %v260
  %v276 = vsub.f32 %v219, %v260
  %v277 = vmul.f32 %v261, %v261
  %v278 = vmul.f32 %v262, %v262
  %v279 = vmul.f32 %v263, %v263
  %v280 = vmul.f32 %v264, %v264
  %v281 = vmul.f32 %v265, %v265
  %v282 = vmul.f32 %v266, %v266
  %v283 = vmul.f32 %v267, %v267
  %v284 = vmul.f32 %v268, %v268
  %v285 = vmul.f32 %v269, %v269
  %v286 = vmul.f32 %v270, %v270
  %v287 = vmul.f32 %v271, %v271
  %v288 = vmul.f32 %v272, %v272
  %v289 = vmul.f32 %v273, %v273
  %v290 = vmul.f32 %v274, %v274
  %v291 = vmul.f32 %v275, %v275
  %v292 = vmul.f32 %v276, %v276
  %v293 = vsel %vm222, %v277, 0.0
  %v294 = vsel %vm222, %v278, 0.0
  %v295 = vadd.f32 %v293, %v294
  %v296 = vsel %vm222, %v279, 0.0
  %v297 = vadd.f32 %v295, %v296
  %v298 = vsel %vm222, %v280, 0.0
  %v299 = vadd.f32 %v297, %v298
  %v300 = vsel %vm222, %v281, 0.0
  %v301 = vadd.f32 %v299, %v300
  %v302 = vsel %vm222, %v282, 0.0
  %v303 = vadd.f32 %v301, %v302
  %v304 = vsel %vm222, %v283, 0.0
  %v305 = vadd.f32 %v303, %v304
  %v306 = vsel %vm222, %v284, 0.0
  %v307 = vadd.f32 %v305, %v306
  %v308 = vsel %vm222, %v285, 0.0
  %v309 = vadd.f32 %v307, %v308
  %v310 = vsel %vm222, %v286, 0.0
  %v311 = vadd.f32 %v309, %v310
  %v312 = vsel %vm222, %v287, 0.0
  %v313 = vadd.f32 %v311, %v312
  %v314 = vsel %vm222, %v288, 0.0
  %v315 = vadd.f32 %v313, %v314
  %v316 = vsel %vm222, %v289, 0.0
  %v317 = vadd.f32 %v315, %v316
  %v318 = vsel %vm222, %v290, 0.0
  %v319 = vadd.f32 %v317, %v318
  %v320 = vsel %vm222, %v291, 0.0
  %v321 = vadd.f32 %v319, %v320
  %v322 = vsel %vm222, %v292, 0.0
  %v323 = vadd.f32 %v321, %v322
  %v324 = vrot.slane %v323, 4
  %v325 = vadd.f32 %v323, %v324
  %v326 = vrot.slane %v325, 2
  %v327 = vadd.f32 %v325, %v326
  %v328 = vrot.slane %v327, 1
  %v329 = vadd.f32 %v327, %v328
  %v330 = vmul.f32 %v329, 0.0078125
  %v331 = vadd.f32 %v330, 1e-05
  %v332 = vrsqrt.pop %v331
  %v333 = vmul.f32 %v261, %v332
  %v334 = vmul.f32 %v262, %v332
  %v335 = vmul.f32 %v263, %v332
  %v336 = vmul.f32 %v264, %v332
  %v337 = vmul.f32 %v265, %v332
  %v338 = vmul.f32 %v266, %v332
  %v339 = vmul.f32 %v267, %v332
  %v340 = vmul.f32 %v268, %v332
  %v341 = vmul.f32 %v269, %v332
  %v342 = vmul.f32 %v270, %v332
  %v343 = vmul.f32 %v271, %v332
  %v344 = vmul.f32 %v272, %v332
  %v345 = vmul.f32 %v273, %v332
  %v346 = vmul.f32 %v274, %v332
  %v347 = vmul.f32 %v275, %v332
  %v348 = vmul.f32 %v276, %v332
  %vm349 = vcmp.ge.f32.partialorder %v333, 0.0
  %vm350 = vcmp.ge.f32.partialorder %v334, 0.0
  %vm351 = vcmp.ge.f32.partialorder %v335, 0.0
  %vm352 = vcmp.ge.f32.partialorder %v336, 0.0
  %vm353 = vcmp.ge.f32.partialorder %v337, 0.0
  %vm354 = vcmp.ge.f32.partialorder %v338, 0.0
  %vm355 = vcmp.ge.f32.partialorder %v339, 0.0
  %vm356 = vcmp.ge.f32.partialorder %v340, 0.0
  %vm357 = vcmp.ge.f32.partialorder %v341, 0.0
  %vm358 = vcmp.ge.f32.partialorder %v342, 0.0
  %vm359 = vcmp.ge.f32.partialorder %v343, 0.0
  %vm360 = vcmp.ge.f32.partialorder %v344, 0.0
  %vm361 = vcmp.ge.f32.partialorder %v345, 0.0
  %vm362 = vcmp.ge.f32.partialorder %v346, 0.0
  %vm363 = vcmp.ge.f32.partialorder %v347, 0.0
  %vm364 = vcmp.ge.f32.partialorder %v348, 0.0
  %v365 = vmul.f32 %v333, 0.01
  %v366 = vmul.f32 %v334, 0.01
  %v367 = vmul.f32 %v335, 0.01
  %v368 = vmul.f32 %v336, 0.01
  %v369 = vmul.f32 %v337, 0.01
  %v370 = vmul.f32 %v338, 0.01
  %v371 = vmul.f32 %v339, 0.01
  %v372 = vmul.f32 %v340, 0.01
  %v373 = vmul.f32 %v341, 0.01
  %v374 = vmul.f32 %v342, 0.01
  %v375 = vmul.f32 %v343, 0.01
  %v376 = vmul.f32 %v344, 0.01
  %v377 = vmul.f32 %v345, 0.01
  %v378 = vmul.f32 %v346, 0.01
  %v379 = vmul.f32 %v347, 0.01
  %v380 = vmul.f32 %v348, 0.01
  %v381 = vsel %vm349, %v333, %v365
  %v382 = vsel %vm350, %v334, %v366
  %v383 = vsel %vm351, %v335, %v367
  %v384 = vsel %vm352, %v336, %v368
  %v385 = vsel %vm353, %v337, %v369
  %v386 = vsel %vm354, %v338, %v370
  %v387 = vsel %vm355, %v339, %v371
  %v388 = vsel %vm356, %v340, %v372
  %v389 = vsel %vm357, %v341, %v373
  %v390 = vsel %vm358, %v342, %v374
  %v391 = vsel %vm359, %v343, %v375
  %v392 = vsel %vm360, %v344, %v376
  %v393 = vsel %vm361, %v345, %v377
  %v394 = vsel %vm362, %v346, %v378
  %v395 = vsel %vm363, %v347, %v379
  %v396 = vsel %vm364, %v348, %v380
  %397 = vst.msk [vmem:[%s3] sm:$0xff] %vm222, %v381
  %398 = vst.msk [vmem:[%s3 + $0x8] sm:$0xff] %vm222, %v382
  %399 = vst.msk [vmem:[%s3 + $0x10] sm:$0xff] %vm222, %v383
  %400 = vst.msk [vmem:[%s3 + $0x18] sm:$0xff] %vm222, %v384
  %401 = vst.msk [vmem:[%s3 + $0x20] sm:$0xff] %vm222, %v385
  %402 = vst.msk [vmem:[%s3 + $0x28] sm:$0xff] %vm222, %v386
  %403 = vst.msk [vmem:[%s3 + $0x30] sm:$0xff] %vm222, %v387
  %404 = vst.msk [vmem:[%s3 + $0x38] sm:$0xff] %vm222, %v388
  %405 = vst.msk [vmem:[%s3 + $0x40] sm:$0xff] %vm222, %v389
  %406 = vst.msk [vmem:[%s3 + $0x48] sm:$0xff] %vm222, %v390
  %407 = vst.msk [vmem:[%s3 + $0x50] sm:$0xff] %vm222, %v391
  %408 = vst.msk [vmem:[%s3 + $0x58] sm:$0xff] %vm222, %v392
  %409 = vst.msk [vmem:[%s3 + $0x60] sm:$0xff] %vm222, %v393
  %410 = vst.msk [vmem:[%s3 + $0x68] sm:$0xff] %vm222, %v394
  %411 = vst.msk [vmem:[%s3 + $0x70] sm:$0xff] %vm222, %v395
  %412 = vst.msk [vmem:[%s3 + $0x78] sm:$0xff] %vm222, %v396
  // Predicated region
  $region14: #{_lambda_.5} parent=0 // pred_check
    _
  $region15: #{_lambda_.5} parent=0 // pred_check_branch
    %414 = sbr.rel (0) target = $region17
  $region16: #{_lambda_.5} parent=0 // pred_region
    _
  $region17: #{_lambda_.5} parent=0 // pred_fallthru
    _
  // Predicated region
  $region18: #{_lambda_.5} parent=0 // pred_check
    _
  $region19: #{_lambda_.5} parent=0 // pred_check_branch
    %416 = sbr.rel (0) target = $region21
  $region20: #{_lambda_.5} parent=0 // pred_region
    _
  $region21: #{_lambda_.5} parent=0 // pred_fallthru
    _

// kernel: _lambda_.6
$region0: #{_lambda_.6}
  #allocation0 [shape = 'u32[]', space=smem, size = 0x4, offset = 0x4, fixed_abs, tag = 'smem constant byte address 0x4 - core index']
  #allocation1 [shape = 'u32[144,128]{1,0:T(1,128)}', space=vmem, size = 0x12000, scoped, tag = 'internal scratch']
  %s0 = inlined_call_operand.vmem [shape: bf16[32,72], index: 0, kind: input, shape index: {}]
  %s1 = inlined_call_operand.vmem [shape: bf16[72,8], index: 1, kind: input, shape index: {}]
  %s2 = inlined_call_operand.vmem [shape: f32[1,8], index: 2, kind: input, shape index: {}]
  %s3 = inlined_call_operand.vmem [shape: f32[32,8], index: 3, kind: output, shape index: {}]
  %s4 = sld [smem:[#allocation0]]
  $region22: #{_lambda_.6} parent=0
    _
  %s6 = ssub.s32 1, %s4
  %s7 = scalar_select 0, %s6, %s4
  // Predicated region
  $region2: #{_lambda_.6} parent=0 // pred_check
    _
  $region3: #{_lambda_.6} parent=0 // pred_check_branch
    %9 = sbr.rel (0) target = $region5
  $region4: #{_lambda_.6} parent=0 // pred_region
    _
  $region5: #{_lambda_.6} parent=0 // pred_fallthru
    _
  // Predicated region
  $region6: #{_lambda_.6} parent=0 // pred_check
    _
  $region7: #{_lambda_.6} parent=0 // pred_check_branch
    %11 = sbr.rel (0) target = $region9
  $region8: #{_lambda_.6} parent=0 // pred_region
    _
  $region9: #{_lambda_.6} parent=0 // pred_fallthru
    _
  // Predicated region
  $region10: #{_lambda_.6} parent=0 // pred_check
    _
  $region11: #{_lambda_.6} parent=0 // pred_check_branch
    %13 = sbr.rel (0) target = $region13
  $region12: #{_lambda_.6} parent=0 // pred_region
    _
  $region13: #{_lambda_.6} parent=0 // pred_fallthru
    _
  %v15 = vld [vmem:[%s0] sm:$0xf]
  %v16 = vld [vmem:[%s0 + $0x4] sm:$0xf]
  %v17 = vld [vmem:[%s0 + $0x8] sm:$0xf]
  %v18 = vld [vmem:[%s0 + $0xc] sm:$0xf]
  %v19 = vld [vmem:[%s1] sm:$0xf]
  %v20 = vld [vmem:[%s1 + $0x4] sm:$0xf]
  %v21 = vld [vmem:[%s1 + $0x8] sm:$0xf]
  %v22 = vld [vmem:[%s1 + $0xc] sm:$0xf]
  %v23 = vld [vmem:[%s1 + $0x10] sm:$0xf]
  %v24 = vld [vmem:[%s1 + $0x14] sm:$0xf]
  %v25 = vld [vmem:[%s1 + $0x18] sm:$0xf]
  %v26 = vld [vmem:[%s1 + $0x1c] sm:$0xf]
  %v27 = vld [vmem:[%s1 + $0x20] sm:$0xf]
  %v28 = vld [vmem:[%s2] sm:$0x1]
  %v30 = vlaneseq
  %v31 = vshrl.u32 %v30, 7
  %v32 = vsub.s32 0, %v31
  %v33 = vrot.slane %v28, %v32
  %v39 = vunpack.c.l.b16 %v15
  %v40 = vunpack.c.l.b16 %v16
  %v41 = vunpack.c.l.b16 %v17
  %v42 = vunpack.c.l.b16 %v18
  %v43 = vpack.c.b16 %v40, %v39
  %v44 = vpack.c.b16 %v42, %v41
  %v54 = vunpack.c.l.b16 %v19
  %v55 = vunpack.c.l.b16 %v20
  %v56 = vunpack.c.l.b16 %v21
  %v57 = vunpack.c.l.b16 %v22
  %v58 = vunpack.c.l.b16 %v23
  %v59 = vunpack.c.l.b16 %v24
  %v60 = vunpack.c.l.b16 %v25
  %v61 = vunpack.c.l.b16 %v26
  %v62 = vunpack.c.l.b16 %v27
  %v63 = vpack.c.b16 %v55, %v54
  %v64 = vpack.c.b16 %v57, %v56
  %v65 = vpack.c.b16 %v59, %v58
  %v66 = vpack.c.b16 %v61, %v60
  %v67 = vpack.c.b16 %v62, %v62
  %vm72 = vcmask 588800
  %v74 = vsel %vm72, %v43, 0
  %v77 = vsel %vm72, %v44, 0
  %vm79 = vcmask 1043456
  %v81 = vsel %vm79, %v67, 0
  %83 = vmatprep.subr.bf16.mxu0 0
  %84 = vmatpush1.bf16.msra.mxu0 0
  %85 = vmatprep.subr.bf16.mxu0 0
  %86 = vmatpush1.bf16.msra.mxu0 0
  %87 = vmatprep.subr.bf16.mxu0 0
  %88 = vmatpush1.bf16.msra.mxu0 0
  %89 = vmatprep.subr.bf16.mxu0 0
  %90 = vmatpush1.bf16.msra.mxu0 %v81
  %91 = vmatprep.subr.bf16.mxu0 0
  %92 = vmatpush1.bf16.msra.mxu0 %v66
  %93 = vmatprep.subr.bf16.mxu0 0
  %94 = vmatpush1.bf16.msra.mxu0 %v65
  %95 = vmatprep.subr.bf16.mxu0 0
  %96 = vmatpush1.bf16.msra.mxu0 %v64
  %97 = vmatprep.subr.bf16.mxu0 0
  %98 = vmatpush1.bf16.msra.mxu0 %v63
  %99 = vmatprep.subr.bf16.mxu0 0
  %100 = vmatpush2.bf16.msra.mxu0 0
  %101 = vmatprep.subr.bf16.mxu0 0
  %102 = vmatpush2.bf16.msra.mxu0 0
  %103 = vmatprep.subr.bf16.mxu0 0
  %104 = vmatpush2.bf16.msra.mxu0 0
  %105 = vmatprep.subr.bf16.mxu0 0
  %106 = vmatpush2.bf16.msra.mxu0 0
  %107 = vmatprep.subr.bf16.mxu0 0
  %108 = vmatpush2.bf16.msra.mxu0 0
  %109 = vmatprep.subr.bf16.mxu0 0
  %110 = vmatpush2.bf16.msra.mxu0 0
  %111 = vmatprep.subr.bf16.mxu0 0
  %112 = vmatpush2.bf16.msra.mxu0 0
  %113 = vmatprep.subr.bf16.mxu0 0
  %114 = vmatpush2.bf16.msra.mxu0 0
  %115 = vmatprep.mubr.bf16.mxu0 0
  %116 = vmatmul.mubr.bf16.gmra.mxu0 %v74
  %v117 = vpop.f32.mrf.mxu0
  %v118 = vadd.f32 %v33, %v117
  %v119 = vpop.f32.mrf.mxu0
  %v120 = vpop.f32.mrf.mxu0
  %v121 = vadd.f32 %v33, %v120
  %v122 = vpop.f32.mrf.mxu0
  %123 = vmatprep.mubr.bf16.mxu0 0
  %124 = vmatmul.mubr.bf16.gmra.mxu0 %v77
  %v125 = vpop.f32.mrf.mxu0
  %v126 = vadd.f32 %v33, %v125
  %v127 = vpop.f32.mrf.mxu0
  %v128 = vpop.f32.mrf.mxu0
  %v129 = vadd.f32 %v33, %v128
  %v130 = vpop.f32.mrf.mxu0
  %131 = vdwg.mxu0
  %vm132 = vcmask 64512
  %133 = vst.msk [vmem:[%s3] sm:$0xff] %vm132, %v118
  %134 = vst.msk [vmem:[%s3 + $0x8] sm:$0xff] %vm132, %v121
  %135 = vst.msk [vmem:[%s3 + $0x10] sm:$0xff] %vm132, %v126
  %136 = vst.msk [vmem:[%s3 + $0x18] sm:$0xff] %vm132, %v129
  // Predicated region
  $region14: #{_lambda_.6} parent=0 // pred_check
    _
  $region15: #{_lambda_.6} parent=0 // pred_check_branch
    %138 = sbr.rel (0) target = $region17
  $region16: #{_lambda_.6} parent=0 // pred_region
    _
  $region17: #{_lambda_.6} parent=0 // pred_fallthru
    _
  // Predicated region
  $region18: #{_lambda_.6} parent=0 // pred_check
    _
  $region19: #{_lambda_.6} parent=0 // pred_check_branch
    %140 = sbr.rel (0) target = $region21
  $region20: #{_lambda_.6} parent=0 // pred_region
    _
  $region21: #{_lambda_.6} parent=0 // pred_fallthru
    _

// kernel: _lambda_.7
$region0: #{_lambda_.7}
  #allocation0 [shape = 'u32[]', space=smem, size = 0x4, offset = 0x4, fixed_abs, tag = 'smem constant byte address 0x4 - core index']
  #allocation1 [shape = 'u32[144,128]{1,0:T(1,128)}', space=vmem, size = 0x12000, scoped, tag = 'internal scratch']
  %s0 = inlined_call_operand.vmem [shape: f32[32,8], index: 0, kind: input, shape index: {}]
  %s1 = inlined_call_operand.vmem [shape: f32[32,8], index: 1, kind: input, shape index: {}]
  %s2 = inlined_call_operand.vmem [shape: f32[8,16], index: 2, kind: input, shape index: {}]
  %s3 = inlined_call_operand.vmem [shape: f32[1,16], index: 3, kind: input, shape index: {}]
  %s4 = inlined_call_operand.vmem [shape: f32[32,16], index: 4, kind: output, shape index: {0}]
  %s5 = inlined_call_operand.vmem [shape: s32[32,1], index: 5, kind: output, shape index: {1}]
  %s6 = inlined_call_operand.hbm [shape: f32[1,1], index: 6, kind: output, shape index: {2}]
  %7 = xla_tuple %s4, %s5, %s6
  %s8 = sld [smem:[#allocation0]]
  $region42: #{_lambda_.7} parent=0
    _
  %s10 = ssub.s32 1, %s8
  %s11 = scalar_select 0, %s10, %s8
  $region1: #{_lambda_.7} parent=0
    #allocation2 [shape = 'u8[512]{0}', space=vmem, size = 0x400, scoped, tag = 'output window, operand 2, single buffered']
    #allocation3 [shape = 's32[1]{0}', space=sflag, size = 0x4, scoped, tag = 'scoped memory for _lambda_.7']
    %12 = vsyncpa [#allocation3], 0
    // Predicated region
    $region2: #{_lambda_.7} parent=1 // pred_check
      _
    $region3: #{_lambda_.7} parent=1 // pred_check_branch
      %14 = sbr.rel (0) target = $region5
    $region4: #{_lambda_.7} parent=1 // pred_region
      _
    $region5: #{_lambda_.7} parent=1 // pred_fallthru
      _
    // Predicated region
    $region6: #{_lambda_.7} parent=1 // pred_check
      _
    $region7: #{_lambda_.7} parent=1 // pred_check_branch
      %16 = sbr.rel (0) target = $region9
    $region8: #{_lambda_.7} parent=1 // pred_region
      _
    $region9: #{_lambda_.7} parent=1 // pred_fallthru
      _
    // Predicated region
    $region10: #{_lambda_.7} parent=1 // pred_check
      _
    $region11: #{_lambda_.7} parent=1 // pred_check_branch
      %18 = sbr.rel (0) target = $region13
    $region12: #{_lambda_.7} parent=1 // pred_region
      _
    $region13: #{_lambda_.7} parent=1 // pred_fallthru
      _
    // Predicated region
    $region14: #{_lambda_.7} parent=1 // pred_check
      _
    $region15: #{_lambda_.7} parent=1 // pred_check_branch
      %20 = sbr.rel (0) target = $region17
    $region16: #{_lambda_.7} parent=1 // pred_region
      _
    $region17: #{_lambda_.7} parent=1 // pred_fallthru
      _
    %v21 = vld [vmem:[%s0] sm:$0xff]
    %v22 = vld [vmem:[%s0 + $0x8] sm:$0xff]
    %v23 = vld [vmem:[%s0 + $0x10] sm:$0xff]
    %v24 = vld [vmem:[%s0 + $0x18] sm:$0xff]
    %v25 = vld [vmem:[%s1] sm:$0xff]
    %v26 = vld [vmem:[%s1 + $0x8] sm:$0xff]
    %v27 = vld [vmem:[%s1 + $0x10] sm:$0xff]
    %v28 = vld [vmem:[%s1 + $0x18] sm:$0xff]
    %v29 = vmul.f32 %v21, %v21
    %v30 = vmul.f32 %v22, %v22
    %v31 = vmul.f32 %v23, %v23
    %v32 = vmul.f32 %v24, %v24
    %vm33 = vcmask 64512
    %v34 = vsel %vm33, %v29, 0.0
    %35 = vadd.xlane.f32.xlu0 %v34
    %v36 = vpop.xlane.xlu0 %35
    %v37 = vsel %vm33, %v30, 0.0
    %38 = vadd.xlane.f32.xlu0 %v37
    %v39 = vpop.xlane.xlu0 %38
    %v40 = vsel %vm33, %v31, 0.0
    %41 = vadd.xlane.f32.xlu0 %v40
    %v42 = vpop.xlane.xlu0 %41
    %v43 = vsel %vm33, %v32, 0.0
    %44 = vadd.xlane.f32.xlu0 %v43
    %v45 = vpop.xlane.xlu0 %44
    %v46 = vmul.f32 %v25, %v25
    %v47 = vmul.f32 %v26, %v26
    %v48 = vmul.f32 %v27, %v27
    %v49 = vmul.f32 %v28, %v28
    %v50 = vsel %vm33, %v46, 0.0
    %51 = vadd.xlane.f32.xlu0 %v50
    %v52 = vpop.xlane.xlu0 %51
    %v53 = vsel %vm33, %v47, 0.0
    %54 = vadd.xlane.f32.xlu0 %v53
    %v55 = vpop.xlane.xlu0 %54
    %v56 = vsel %vm33, %v48, 0.0
    %57 = vadd.xlane.f32.xlu0 %v56
    %v58 = vpop.xlane.xlu0 %57
    %v59 = vsel %vm33, %v49, 0.0
    %60 = vadd.xlane.f32.xlu0 %v59
    %v61 = vpop.xlane.xlu0 %60
    %62 = vxpose.xlu0.b32.start [1/16] %v52, 128
    %63 = vxpose.xlu0.b32.cont [2/16] %v55, 128
    %64 = vxpose.xlu0.b32.cont [3/16] %v58, 128
    %65 = vxpose.xlu0.b32.cont [4/16] %v61, 128
    %66 = vxpose.xlu0.b32.cont [5/16] 0.0, 128
    %67 = vxpose.xlu0.b32.cont [6/16] 0.0, 128
    %68 = vxpose.xlu0.b32.cont [7/16] 0.0, 128
    %69 = vxpose.xlu0.b32.cont [8/16] 0.0, 128
    %70 = vxpose.xlu0.b32.cont [9/16] 0.0, 128
    %71 = vxpose.xlu0.b32.cont [10/16] 0.0, 128
    %72 = vxpose.xlu0.b32.cont [11/16] 0.0, 128
    %73 = vxpose.xlu0.b32.cont [12/16] 0.0, 128
    %74 = vxpose.xlu0.b32.cont [13/16] 0.0, 128
    %75 = vxpose.xlu0.b32.cont [14/16] 0.0, 128
    %76 = vxpose.xlu0.b32.cont [15/16] 0.0, 128
    %77 = vxpose.xlu0.b32.end [16/16] 0.0, 128
    %v78 = vpop.trf.xlu0
    %v79 = vpop.trf.xlu0
    %v80 = vpop.trf.xlu0
    %v81 = vpop.trf.xlu0
    %v82 = vpop.trf.xlu0
    %v83 = vpop.trf.xlu0
    %v84 = vpop.trf.xlu0
    %v85 = vpop.trf.xlu0
    %v86 = vpop.trf.xlu0
    %v87 = vpop.trf.xlu0
    %v88 = vpop.trf.xlu0
    %v89 = vpop.trf.xlu0
    %v90 = vpop.trf.xlu0
    %v91 = vpop.trf.xlu0
    %v92 = vpop.trf.xlu0
    %v93 = vpop.trf.xlu0
    %v95 = vsel %vm33, %v21, 0
    %v98 = vsel %vm33, %v22, 0
    %v101 = vsel %vm33, %v23, 0
    %v104 = vsel %vm33, %v24, 0
    %v107 = vsel %vm33, %v25, 0
    %v110 = vsel %vm33, %v26, 0
    %v113 = vsel %vm33, %v27, 0
    %v116 = vsel %vm33, %v28, 0
    %118 = vmatprep.subr.mxu0 0.0
    %119 = vmatpush1.xpose.msra.mxu0 0.0
    %120 = vmatprep.subr.mxu0 0.0
    %121 = vmatpush1.xpose.msra.mxu0 0.0
    %122 = vmatprep.subr.mxu0 0.0
    %123 = vmatpush1.xpose.msra.mxu0 0.0
    %124 = vmatprep.subr.mxu0 0.0
    %125 = vmatpush1.xpose.msra.mxu0 0.0
    %126 = vmatprep.subr.mxu0 0.0
    %127 = vmatpush1.xpose.msra.mxu0 0.0
    %128 = vmatprep.subr.mxu0 0.0
    %129 = vmatpush1.xpose.msra.mxu0 0.0
    %130 = vmatprep.subr.mxu0 0.0
    %131 = vmatpush1.xpose.msra.mxu0 0.0
    %132 = vmatprep.subr.mxu0 0.0
    %133 = vmatpush1.xpose.msra.mxu0 0.0
    %134 = vmatprep.subr.mxu0 0.0
    %135 = vmatpush1.xpose.msra.mxu0 0.0
    %136 = vmatprep.subr.mxu0 0.0
    %137 = vmatpush1.xpose.msra.mxu0 0.0
    %138 = vmatprep.subr.mxu0 0.0
    %139 = vmatpush1.xpose.msra.mxu0 0.0
    %140 = vmatprep.subr.mxu0 0.0
    %141 = vmatpush1.xpose.msra.mxu0 0.0
    %142 = vmatprep.subr.mxu0 0.0
    %143 = vmatpush1.xpose.msra.mxu0 %v116
    %144 = vmatprep.subr.mxu0 0.0
    %145 = vmatpush1.xpose.msra.mxu0 %v113
    %146 = vmatprep.subr.mxu0 0.0
    %147 = vmatpush1.xpose.msra.mxu0 %v110
    %148 = vmatprep.subr.mxu0 0.0
    %149 = vmatpush1.xpose.msra.mxu0 %v107
    %150 = vmatprep.subr.mxu0 0.0
    %151 = vmatpush2.xpose.msra.mxu0 0.0
    %152 = vmatprep.subr.mxu0 0.0
    %153 = vmatpush2.xpose.msra.mxu0 0.0
    %154 = vmatprep.subr.mxu0 0.0
    %155 = vmatpush2.xpose.msra.mxu0 0.0
    %156 = vmatprep.subr.mxu0 0.0
    %157 = vmatpush2.xpose.msra.mxu0 0.0
    %158 = vmatprep.subr.mxu0 0.0
    %159 = vmatpush2.xpose.msra.mxu0 0.0
    %160 = vmatprep.subr.mxu0 0.0
    %161 = vmatpush2.xpose.msra.mxu0 0.0
    %162 = vmatprep.subr.mxu0 0.0
    %163 = vmatpush2.xpose.msra.mxu0 0.0
    %164 = vmatprep.subr.mxu0 0.0
    %165 = vmatpush2.xpose.msra.mxu0 0.0
    %166 = vmatprep.subr.mxu0 0.0
    %167 = vmatpush2.xpose.msra.mxu0 0.0
    %168 = vmatprep.subr.mxu0 0.0
    %169 = vmatpush2.xpose.msra.mxu0 0.0
    %170 = vmatprep.subr.mxu0 0.0
    %171 = vmatpush2.xpose.msra.mxu0 0.0
    %172 = vmatprep.subr.mxu0 0.0
    %173 = vmatpush2.xpose.msra.mxu0 0.0
    %174 = vmatprep.subr.mxu0 0.0
    %175 = vmatpush2.xpose.msra.mxu0 0.0
    %176 = vmatprep.subr.mxu0 0.0
    %177 = vmatpush2.xpose.msra.mxu0 0.0
    %178 = vmatprep.subr.mxu0 0.0
    %179 = vmatpush2.xpose.msra.mxu0 0.0
    %180 = vmatprep.subr.mxu0 0.0
    %181 = vmatpush2.xpose.msra.mxu0 0.0
    %182 = vmatprep.mubr.f32.mxu0 0.0
    %183 = vmatmul.mubr.f32.gmra.mxu0 %v95
    %v184 = vpop.f32.mrf.mxu0
    %v185 = vadd.f32 0.0, %v184
    %v186 = vpop.f32.mrf.mxu0
    %187 = vmatprep.mubr.f32.mxu0 0.0
    %188 = vmatmul.mubr.f32.gmra.mxu0 %v98
    %v189 = vpop.f32.mrf.mxu0
    %v190 = vadd.f32 0.0, %v189
    %v191 = vpop.f32.mrf.mxu0
    %192 = vmatprep.mubr.f32.mxu0 0.0
    %193 = vmatmul.mubr.f32.gmra.mxu0 %v101
    %v194 = vpop.f32.mrf.mxu0
    %v195 = vadd.f32 0.0, %v194
    %v196 = vpop.f32.mrf.mxu0
    %197 = vmatprep.mubr.f32.mxu0 0.0
    %198 = vmatmul.mubr.f32.gmra.mxu0 %v104
    %v199 = vpop.f32.mrf.mxu0
    %v200 = vadd.f32 0.0, %v199
    %v201 = vpop.f32.mrf.mxu0
    %202 = vdwg.mxu0
    %v203 = vlaneseq
    %v204 = vshrl.u32 %v203, 7
    %v205 = vsub.s32 0, %v204
    %v206 = vrot.slane %v78, %v205
    %v207 = vadd.f32 %v36, %v206
    %v208 = vadd.f32 %v39, %v206
    %v209 = vadd.f32 %v42, %v206
    %v210 = vadd.f32 %v45, %v206
    %v211 = vmul.f32 %v185, 2.0
    %v212 = vmul.f32 %v190, 2.0
    %v213 = vmul.f32 %v195, 2.0
    %v214 = vmul.f32 %v200, 2.0
    %v215 = vsub.f32 %v207, %v211
    %v216 = vsub.f32 %v208, %v212
    %v217 = vsub.f32 %v209, %v213
    %v218 = vsub.f32 %v210, %v214
    %vm219 = vcmask 261120
    %v220 = vsel %vm219, %v215, inf
    %221 = vmin.xlane.f32.xlu0 %v220
    %v222 = vpop.xlane.xlu0 %221
    %v223 = vsel %vm219, %v216, inf
    %224 = vmin.xlane.f32.xlu0 %v223
    %v225 = vpop.xlane.xlu0 %224
    %v226 = vsel %vm219, %v217, inf
    %227 = vmin.xlane.f32.xlu0 %v226
    %v228 = vpop.xlane.xlu0 %227
    %v229 = vsel %vm219, %v218, inf
    %230 = vmin.xlane.f32.xlu0 %v229
    %v231 = vpop.xlane.xlu0 %230
    %v232 = vlaneseq
    %v233 = vand.u32 %v232, 127
    %v234 = vcvt.s32.f32 %v233
    %vm235 = vcmp.le.f32.partialorder %v215, %v222
    %vm236 = vcmp.le.f32.partialorder %v216, %v225
    %vm237 = vcmp.le.f32.partialorder %v217, %v228
    %vm238 = vcmp.le.f32.partialorder %v218, %v231
    %v239 = vsel %vm235, %v234, 32.0
    %v240 = vsel %vm236, %v234, 32.0
    %v241 = vsel %vm237, %v234, 32.0
    %v242 = vsel %vm238, %v234, 32.0
    %v243 = vsel %vm219, %v239, inf
    %244 = vmin.xlane.f32.xlu0 %v243
    %v245 = vpop.xlane.xlu0 %244
    %v246 = vsel %vm219, %v240, inf
    %247 = vmin.xlane.f32.xlu0 %v246
    %v248 = vpop.xlane.xlu0 %247
    %v249 = vsel %vm219, %v241, inf
    %250 = vmin.xlane.f32.xlu0 %v249
    %v251 = vpop.xlane.xlu0 %250
    %v252 = vsel %vm219, %v242, inf
    %253 = vmin.xlane.f32.xlu0 %v252
    %v254 = vpop.xlane.xlu0 %253
    %vm255 = vcmp.eq.f32.partialorder %v234, %v245
    %vm256 = vcmp.eq.f32.partialorder %v234, %v248
    %vm257 = vcmp.eq.f32.partialorder %v234, %v251
    %vm258 = vcmp.eq.f32.partialorder %v234, %v254
    %v259 = vsel %vm255, 1, 0
    %v260 = vsel %vm256, 1, 0
    %v261 = vsel %vm257, 1, 0
    %v262 = vsel %vm258, 1, 0
    %v263 = vcvt.s32.f32 %v259
    %v264 = vcvt.s32.f32 %v260
    %v265 = vcvt.s32.f32 %v261
    %v266 = vcvt.s32.f32 %v262
    %v268 = vsel %vm219, %v263, 0
    %v271 = vsel %vm219, %v264, 0
    %v274 = vsel %vm219, %v265, 0
    %v277 = vsel %vm219, %v266, 0
    %279 = vmatprep.subr.mxu0 0.0
    %280 = vmatpush1.msra.mxu0 0.0
    %281 = vmatprep.subr.mxu0 0.0
    %282 = vmatpush1.msra.mxu0 0.0
    %283 = vmatprep.subr.mxu0 0.0
    %284 = vmatpush1.msra.mxu0 0.0
    %285 = vmatprep.subr.mxu0 0.0
    %286 = vmatpush1.msra.mxu0 0.0
    %287 = vmatprep.subr.mxu0 0.0
    %288 = vmatpush1.msra.mxu0 0.0
    %289 = vmatprep.subr.mxu0 0.0
    %290 = vmatpush1.msra.mxu0 0.0
    %291 = vmatprep.subr.mxu0 0.0
    %292 = vmatpush1.msra.mxu0 0.0
    %293 = vmatprep.subr.mxu0 0.0
    %294 = vmatpush1.msra.mxu0 0.0
    %295 = vmatprep.subr.mxu0 0.0
    %296 = vmatpush1.msra.mxu0 0.0
    %297 = vmatprep.subr.mxu0 0.0
    %298 = vmatpush1.msra.mxu0 0.0
    %299 = vmatprep.subr.mxu0 0.0
    %300 = vmatpush1.msra.mxu0 0.0
    %301 = vmatprep.subr.mxu0 0.0
    %302 = vmatpush1.msra.mxu0 0.0
    %303 = vmatprep.subr.mxu0 0.0
    %304 = vmatpush1.msra.mxu0 %v28
    %305 = vmatprep.subr.mxu0 0.0
    %306 = vmatpush1.msra.mxu0 %v27
    %307 = vmatprep.subr.mxu0 0.0
    %308 = vmatpush1.msra.mxu0 %v26
    %309 = vmatprep.subr.mxu0 0.0
    %310 = vmatpush1.msra.mxu0 %v25
    %311 = vmatprep.subr.mxu0 0.0
    %312 = vmatpush2.msra.mxu0 0.0
    %313 = vmatprep.subr.mxu0 0.0
    %314 = vmatpush2.msra.mxu0 0.0
    %315 = vmatprep.subr.mxu0 0.0
    %316 = vmatpush2.msra.mxu0 0.0
    %317 = vmatprep.subr.mxu0 0.0
    %318 = vmatpush2.msra.mxu0 0.0
    %319 = vmatprep.subr.mxu0 0.0
    %320 = vmatpush2.msra.mxu0 0.0
    %321 = vmatprep.subr.mxu0 0.0
    %322 = vmatpush2.msra.mxu0 0.0
    %323 = vmatprep.subr.mxu0 0.0
    %324 = vmatpush2.msra.mxu0 0.0
    %325 = vmatprep.subr.mxu0 0.0
    %326 = vmatpush2.msra.mxu0 0.0
    %327 = vmatprep.subr.mxu0 0.0
    %328 = vmatpush2.msra.mxu0 0.0
    %329 = vmatprep.subr.mxu0 0.0
    %330 = vmatpush2.msra.mxu0 0.0
    %331 = vmatprep.subr.mxu0 0.0
    %332 = vmatpush2.msra.mxu0 0.0
    %333 = vmatprep.subr.mxu0 0.0
    %334 = vmatpush2.msra.mxu0 0.0
    %335 = vmatprep.subr.mxu0 0.0
    %336 = vmatpush2.msra.mxu0 0.0
    %337 = vmatprep.subr.mxu0 0.0
    %338 = vmatpush2.msra.mxu0 0.0
    %339 = vmatprep.subr.mxu0 0.0
    %340 = vmatpush2.msra.mxu0 0.0
    %341 = vmatprep.subr.mxu0 0.0
    %342 = vmatpush2.msra.mxu0 0.0
    %343 = vmatprep.mubr.f32.mxu0 0.0
    %344 = vmatmul.mubr.f32.gmra.mxu0 %v268
    %v345 = vpop.f32.mrf.mxu0
    %v346 = vadd.f32 0.0, %v345
    %v347 = vpop.f32.mrf.mxu0
    %348 = vmatprep.mubr.f32.mxu0 0.0
    %349 = vmatmul.mubr.f32.gmra.mxu0 %v271
    %v350 = vpop.f32.mrf.mxu0
    %v351 = vadd.f32 0.0, %v350
    %v352 = vpop.f32.mrf.mxu0
    %353 = vmatprep.mubr.f32.mxu0 0.0
    %354 = vmatmul.mubr.f32.gmra.mxu0 %v274
    %v355 = vpop.f32.mrf.mxu0
    %v356 = vadd.f32 0.0, %v355
    %v357 = vpop.f32.mrf.mxu0
    %358 = vmatprep.mubr.f32.mxu0 0.0
    %359 = vmatmul.mubr.f32.gmra.mxu0 %v277
    %v360 = vpop.f32.mrf.mxu0
    %v361 = vadd.f32 0.0, %v360
    %v362 = vpop.f32.mrf.mxu0
    %363 = vdwg.mxu0
    %v364 = vcvt.f32.s32.to.zero.pseudo %v245
    %v365 = vcvt.f32.s32.to.zero.pseudo %v248
    %v366 = vcvt.f32.s32.to.zero.pseudo %v251
    %v367 = vcvt.f32.s32.to.zero.pseudo %v254
    %vm368 = vcmask 7168
    %369 = vst.msk [vmem:[%s5] sm:$0xff] %vm368, %v364
    %370 = vst.msk [vmem:[%s5 + $0x8] sm:$0xff] %vm368, %v365
    %371 = vst.msk [vmem:[%s5 + $0x10] sm:$0xff] %vm368, %v366
    %372 = vst.msk [vmem:[%s5 + $0x18] sm:$0xff] %vm368, %v367
    %v373 = vsub.f32 %v21, %v346
    %v374 = vsub.f32 %v22, %v351
    %v375 = vsub.f32 %v23, %v356
    %v376 = vsub.f32 %v24, %v361
    %v377 = vmul.f32 %v373, %v373
    %v378 = vmul.f32 %v374, %v374
    %v379 = vmul.f32 %v375, %v375
    %v380 = vmul.f32 %v376, %v376
    %v381 = vsel %vm33, %v377, 0.0
    %382 = vadd.xlane.f32.xlu0 %v381
    %v383 = vpop.xlane.xlu0 %382
    %v384 = vsel %vm33, %v378, 0.0
    %385 = vadd.xlane.f32.xlu0 %v384
    %v386 = vpop.xlane.xlu0 %385
    %v387 = vsel %vm33, %v379, 0.0
    %388 = vadd.xlane.f32.xlu0 %v387
    %v389 = vpop.xlane.xlu0 %388
    %v390 = vsel %vm33, %v380, 0.0
    %391 = vadd.xlane.f32.xlu0 %v390
    %v392 = vpop.xlane.xlu0 %391
    %v393 = vadd.f32 %v383, %v386
    %v394 = vadd.f32 %v393, %v389
    %v395 = vadd.f32 %v394, %v392
    %v396 = vrot.slane %v395, 4
    %v397 = vadd.f32 %v395, %v396
    %v398 = vrot.slane %v397, 2
    %v399 = vadd.f32 %v397, %v398
    %v400 = vrot.slane %v399, 1
    %v401 = vadd.f32 %v399, %v400
    %v402 = vrcp.pop 256.0
    %v403 = vmul.f32 %v401, %v402
    %vm404 = vcmask 0
    %405 = vst.msk [vmem:[#allocation2] sm:$0x1] %vm404, %v403
    %v406 = vld [vmem:[%s2] sm:$0xff]
    %v407 = vld [vmem:[%s3] sm:$0x1]
    %v409 = vlaneseq
    %v410 = vshrl.u32 %v409, 7
    %v411 = vsub.s32 0, %v410
    %v412 = vrot.slane %v407, %v411
    %v415 = vsel %vm33, %v346, 0
    %v418 = vsel %vm33, %v351, 0
    %v421 = vsel %vm33, %v356, 0
    %v424 = vsel %vm33, %v361, 0
    %426 = vmatprep.subr.mxu0 0.0
    %427 = vmatpush1.msra.mxu0 0.0
    %428 = vmatprep.subr.mxu0 0.0
    %429 = vmatpush1.msra.mxu0 0.0
    %430 = vmatprep.subr.mxu0 0.0
    %431 = vmatpush1.msra.mxu0 0.0
    %432 = vmatprep.subr.mxu0 0.0
    %433 = vmatpush1.msra.mxu0 0.0
    %434 = vmatprep.subr.mxu0 0.0
    %435 = vmatpush1.msra.mxu0 0.0
    %436 = vmatprep.subr.mxu0 0.0
    %437 = vmatpush1.msra.mxu0 0.0
    %438 = vmatprep.subr.mxu0 0.0
    %439 = vmatpush1.msra.mxu0 0.0
    %440 = vmatprep.subr.mxu0 0.0
    %441 = vmatpush1.msra.mxu0 0.0
    %442 = vmatprep.subr.mxu0 0.0
    %443 = vmatpush1.msra.mxu0 0.0
    %444 = vmatprep.subr.mxu0 0.0
    %445 = vmatpush1.msra.mxu0 0.0
    %446 = vmatprep.subr.mxu0 0.0
    %447 = vmatpush1.msra.mxu0 0.0
    %448 = vmatprep.subr.mxu0 0.0
    %449 = vmatpush1.msra.mxu0 0.0
    %450 = vmatprep.subr.mxu0 0.0
    %451 = vmatpush1.msra.mxu0 0.0
    %452 = vmatprep.subr.mxu0 0.0
    %453 = vmatpush1.msra.mxu0 0.0
    %454 = vmatprep.subr.mxu0 0.0
    %455 = vmatpush1.msra.mxu0 0.0
    %456 = vmatprep.subr.mxu0 0.0
    %457 = vmatpush1.msra.mxu0 %v406
    %458 = vmatprep.subr.mxu0 0.0
    %459 = vmatpush2.msra.mxu0 0.0
    %460 = vmatprep.subr.mxu0 0.0
    %461 = vmatpush2.msra.mxu0 0.0
    %462 = vmatprep.subr.mxu0 0.0
    %463 = vmatpush2.msra.mxu0 0.0
    %464 = vmatprep.subr.mxu0 0.0
    %465 = vmatpush2.msra.mxu0 0.0
    %466 = vmatprep.subr.mxu0 0.0
    %467 = vmatpush2.msra.mxu0 0.0
    %468 = vmatprep.subr.mxu0 0.0
    %469 = vmatpush2.msra.mxu0 0.0
    %470 = vmatprep.subr.mxu0 0.0
    %471 = vmatpush2.msra.mxu0 0.0
    %472 = vmatprep.subr.mxu0 0.0
    %473 = vmatpush2.msra.mxu0 0.0
    %474 = vmatprep.subr.mxu0 0.0
    %475 = vmatpush2.msra.mxu0 0.0
    %476 = vmatprep.subr.mxu0 0.0
    %477 = vmatpush2.msra.mxu0 0.0
    %478 = vmatprep.subr.mxu0 0.0
    %479 = vmatpush2.msra.mxu0 0.0
    %480 = vmatprep.subr.mxu0 0.0
    %481 = vmatpush2.msra.mxu0 0.0
    %482 = vmatprep.subr.mxu0 0.0
    %483 = vmatpush2.msra.mxu0 0.0
    %484 = vmatprep.subr.mxu0 0.0
    %485 = vmatpush2.msra.mxu0 0.0
    %486 = vmatprep.subr.mxu0 0.0
    %487 = vmatpush2.msra.mxu0 0.0
    %488 = vmatprep.subr.mxu0 0.0
    %489 = vmatpush2.msra.mxu0 0.0
    %490 = vmatprep.mubr.f32.mxu0 0.0
    %491 = vmatmul.mubr.f32.gmra.mxu0 %v415
    %v492 = vpop.f32.mrf.mxu0
    %v493 = vadd.f32 %v412, %v492
    %v494 = vpop.f32.mrf.mxu0
    %495 = vmatprep.mubr.f32.mxu0 0.0
    %496 = vmatmul.mubr.f32.gmra.mxu0 %v418
    %v497 = vpop.f32.mrf.mxu0
    %v498 = vadd.f32 %v412, %v497
    %v499 = vpop.f32.mrf.mxu0
    %500 = vmatprep.mubr.f32.mxu0 0.0
    %501 = vmatmul.mubr.f32.gmra.mxu0 %v421
    %v502 = vpop.f32.mrf.mxu0
    %v503 = vadd.f32 %v412, %v502
    %v504 = vpop.f32.mrf.mxu0
    %505 = vmatprep.mubr.f32.mxu0 0.0
    %506 = vmatmul.mubr.f32.gmra.mxu0 %v424
    %v507 = vpop.f32.mrf.mxu0
    %v508 = vadd.f32 %v412, %v507
    %v509 = vpop.f32.mrf.mxu0
    %510 = vdwg.mxu0
    %vm511 = vcmask 130048
    %512 = vst.msk [vmem:[%s4] sm:$0xff] %vm511, %v493
    %513 = vst.msk [vmem:[%s4 + $0x8] sm:$0xff] %vm511, %v498
    %514 = vst.msk [vmem:[%s4 + $0x10] sm:$0xff] %vm511, %v503
    %515 = vst.msk [vmem:[%s4 + $0x18] sm:$0xff] %vm511, %v508
    // Predicated region
    $region18: #{_lambda_.7} parent=1 // pred_check
      _
    $region19: #{_lambda_.7} parent=1 // pred_check_branch
      %517 = sbr.rel (0) target = $region21
    $region20: #{_lambda_.7} parent=1 // pred_region
      _
    $region21: #{_lambda_.7} parent=1 // pred_fallthru
      _
    // Predicated region
    $region22: #{_lambda_.7} parent=1 // pred_check
      _
    $region23: #{_lambda_.7} parent=1 // pred_check_branch
      %519 = sbr.rel (0) target = $region25
    $region24: #{_lambda_.7} parent=1 // pred_region
      _
    $region25: #{_lambda_.7} parent=1 // pred_fallthru
      _
    // Predicated region
    $region26: #{_lambda_.7} parent=1 // pred_check
      _
    $region27: #{_lambda_.7} parent=1 // pred_check_branch
      %521 = sbr.rel (0) target = $region29
    $region28: #{_lambda_.7} parent=1 // pred_region
      %s523 = ssub.s32 16, 16
      %524 = vsyncadd [#allocation3], %s523
      %s526 = sshll.u32 [#allocation2], 4
      %s527 = int_to_ptr.vmem [resolvable:$true] %s526
      %529 = dma.vmem_to_hbm [thread:$0]  %s527, 16, %s6, [#allocation3]
    $region29: #{_lambda_.7} parent=1 // pred_fallthru
      _
    // Predicated region
    $region30: #{_lambda_.7} parent=1 // pred_check
      _
    $region31: #{_lambda_.7} parent=1 // pred_check_branch
      %531 = sbr.rel (0) target = $region33
    $region32: #{_lambda_.7} parent=1 // pred_region
      _
    $region33: #{_lambda_.7} parent=1 // pred_fallthru
      _
    // Predicated region
    $region34: #{_lambda_.7} parent=1 // pred_check
      _
    $region35: #{_lambda_.7} parent=1 // pred_check_branch
      %533 = sbr.rel (0) target = $region37
    $region36: #{_lambda_.7} parent=1 // pred_region
      _
    $region37: #{_lambda_.7} parent=1 // pred_fallthru
      _
    // Predicated region
    $region38: #{_lambda_.7} parent=1 // pred_check
      _
    $region39: #{_lambda_.7} parent=1 // pred_check_branch
      %535 = sbr.rel (0) target = $region41
    $region40: #{_lambda_.7} parent=1 // pred_region
      %536 = dma.done [#allocation3], 16
    $region41: #{_lambda_.7} parent=1 // pred_fallthru
      _
    %537 = vsyncpa [#allocation3], 1

// kernel: _lambda_.8
$region0: #{_lambda_.8}
  #allocation0 [shape = 'u32[]', space=smem, size = 0x4, offset = 0x4, fixed_abs, tag = 'smem constant byte address 0x4 - core index']
  #allocation1 [shape = 'u32[144,128]{1,0:T(1,128)}', space=vmem, size = 0x12000, scoped, tag = 'internal scratch']
  %s0 = inlined_call_operand.vmem [shape: bf16[200,256], index: 0, kind: input, shape index: {}]
  %s1 = inlined_call_operand.vmem [shape: bf16[256,8], index: 1, kind: input, shape index: {}]
  %s2 = inlined_call_operand.vmem [shape: f32[1,8], index: 2, kind: input, shape index: {}]
  %s3 = inlined_call_operand.vmem [shape: f32[200,8], index: 3, kind: output, shape index: {}]
  %s4 = sld [smem:[#allocation0]]
  $region22: #{_lambda_.8} parent=0
    _
  %s6 = ssub.s32 1, %s4
  %s7 = scalar_select 0, %s6, %s4
  // Predicated region
  $region2: #{_lambda_.8} parent=0 // pred_check
    _
  $region3: #{_lambda_.8} parent=0 // pred_check_branch
    %9 = sbr.rel (0) target = $region5
  $region4: #{_lambda_.8} parent=0 // pred_region
    _
  $region5: #{_lambda_.8} parent=0 // pred_fallthru
    _
  // Predicated region
  $region6: #{_lambda_.8} parent=0 // pred_check
    _
  $region7: #{_lambda_.8} parent=0 // pred_check_branch
    %11 = sbr.rel (0) target = $region9
  $region8: #{_lambda_.8} parent=0 // pred_region
    _
  $region9: #{_lambda_.8} parent=0 // pred_fallthru
    _
  // Predicated region
  $region10: #{_lambda_.8} parent=0 // pred_check
    _
  $region11: #{_lambda_.8} parent=0 // pred_check_branch
    %13 = sbr.rel (0) target = $region13
  $region12: #{_lambda_.8} parent=0 // pred_region
    _
  $region13: #{_lambda_.8} parent=0 // pred_fallthru
    _
  %v15 = vld [vmem:[%s0] sm:$0xff]
  %v16 = vld [vmem:[%s0 + $0x8] sm:$0xff]
  %v17 = vld [vmem:[%s0 + $0x10] sm:$0xff]
  %v18 = vld [vmem:[%s0 + $0x18] sm:$0xff]
  %v19 = vld [vmem:[%s0 + $0x20] sm:$0xff]
  %v20 = vld [vmem:[%s0 + $0x28] sm:$0xff]
  %v21 = vld [vmem:[%s0 + $0x30] sm:$0xff]
  %v22 = vld [vmem:[%s0 + $0x38] sm:$0xff]
  %v23 = vld [vmem:[%s0 + $0x40] sm:$0xff]
  %v24 = vld [vmem:[%s0 + $0x48] sm:$0xff]
  %v25 = vld [vmem:[%s0 + $0x50] sm:$0xff]
  %v26 = vld [vmem:[%s0 + $0x58] sm:$0xff]
  %v27 = vld [vmem:[%s0 + $0x60] sm:$0xff]
  %v28 = vld [vmem:[%s0 + $0x68] sm:$0xff]
  %v29 = vld [vmem:[%s0 + $0x70] sm:$0xff]
  %v30 = vld [vmem:[%s0 + $0x78] sm:$0xff]
  %v31 = vld [vmem:[%s0 + $0x80] sm:$0xff]
  %v32 = vld [vmem:[%s0 + $0x88] sm:$0xff]
  %v33 = vld [vmem:[%s0 + $0x90] sm:$0xff]
  %v34 = vld [vmem:[%s0 + $0x98] sm:$0xff]
  %v35 = vld [vmem:[%s0 + $0xa0] sm:$0xff]
  %v36 = vld [vmem:[%s0 + $0xa8] sm:$0xff]
  %v37 = vld [vmem:[%s0 + $0xb0] sm:$0xff]
  %v38 = vld [vmem:[%s0 + $0xb8] sm:$0xff]
  %v39 = vld [vmem:[%s0 + $0xc0] sm:$0xff]
  %v40 = vld [vmem:[%s1] sm:$0xf]
  %v41 = vld [vmem:[%s1 + $0x4] sm:$0xf]
  %v42 = vld [vmem:[%s1 + $0x8] sm:$0xf]
  %v43 = vld [vmem:[%s1 + $0xc] sm:$0xf]
  %v44 = vld [vmem:[%s1 + $0x10] sm:$0xf]
  %v45 = vld [vmem:[%s1 + $0x14] sm:$0xf]
  %v46 = vld [vmem:[%s1 + $0x18] sm:$0xf]
  %v47 = vld [vmem:[%s1 + $0x1c] sm:$0xf]
  %v48 = vld [vmem:[%s1 + $0x20] sm:$0xf]
  %v49 = vld [vmem:[%s1 + $0x24] sm:$0xf]
  %v50 = vld [vmem:[%s1 + $0x28] sm:$0xf]
  %v51 = vld [vmem:[%s1 + $0x2c] sm:$0xf]
  %v52 = vld [vmem:[%s1 + $0x30] sm:$0xf]
  %v53 = vld [vmem:[%s1 + $0x34] sm:$0xf]
  %v54 = vld [vmem:[%s1 + $0x38] sm:$0xf]
  %v55 = vld [vmem:[%s1 + $0x3c] sm:$0xf]
  %v56 = vld [vmem:[%s1 + $0x40] sm:$0xf]
  %v57 = vld [vmem:[%s1 + $0x44] sm:$0xf]
  %v58 = vld [vmem:[%s1 + $0x48] sm:$0xf]
  %v59 = vld [vmem:[%s1 + $0x4c] sm:$0xf]
  %v60 = vld [vmem:[%s1 + $0x50] sm:$0xf]
  %v61 = vld [vmem:[%s1 + $0x54] sm:$0xf]
  %v62 = vld [vmem:[%s1 + $0x58] sm:$0xf]
  %v63 = vld [vmem:[%s1 + $0x5c] sm:$0xf]
  %v64 = vld [vmem:[%s1 + $0x60] sm:$0xf]
  %v65 = vld [vmem:[%s1 + $0x64] sm:$0xf]
  %v66 = vld [vmem:[%s1 + $0x68] sm:$0xf]
  %v67 = vld [vmem:[%s1 + $0x6c] sm:$0xf]
  %v68 = vld [vmem:[%s1 + $0x70] sm:$0xf]
  %v69 = vld [vmem:[%s1 + $0x74] sm:$0xf]
  %v70 = vld [vmem:[%s1 + $0x78] sm:$0xf]
  %v71 = vld [vmem:[%s1 + $0x7c] sm:$0xf]
  %v72 = vld [vmem:[%s2] sm:$0x1]
  %v74 = vlaneseq
  %v75 = vshrl.u32 %v74, 7
  %v76 = vsub.s32 0, %v75
  %v77 = vrot.slane %v72, %v76
  %v104 = vunpack.c.l.b16 %v15
  %v105 = vunpack.c.h.b16 %v15
  %v106 = vunpack.c.l.b16 %v16
  %v107 = vunpack.c.h.b16 %v16
  %v108 = vunpack.c.l.b16 %v17
  %v109 = vunpack.c.h.b16 %v17
  %v110 = vunpack.c.l.b16 %v18
  %v111 = vunpack.c.h.b16 %v18
  %v112 = vunpack.c.l.b16 %v19
  %v113 = vunpack.c.h.b16 %v19
  %v114 = vunpack.c.l.b16 %v20
  %v115 = vunpack.c.h.b16 %v20
  %v116 = vunpack.c.l.b16 %v21
  %v117 = vunpack.c.h.b16 %v21
  %v118 = vunpack.c.l.b16 %v22
  %v119 = vunpack.c.h.b16 %v22
  %v120 = vunpack.c.l.b16 %v23
  %v121 = vunpack.c.h.b16 %v23
  %v122 = vunpack.c.l.b16 %v24
  %v123 = vunpack.c.h.b16 %v24
  %v124 = vunpack.c.l.b16 %v25
  %v125 = vunpack.c.h.b16 %v25
  %v126 = vunpack.c.l.b16 %v26
  %v127 = vunpack.c.h.b16 %v26
  %v128 = vunpack.c.l.b16 %v27
  %v129 = vunpack.c.h.b16 %v27
  %v130 = vunpack.c.l.b16 %v28
  %v131 = vunpack.c.h.b16 %v28
  %v132 = vunpack.c.l.b16 %v29
  %v133 = vunpack.c.h.b16 %v29
  %v134 = vunpack.c.l.b16 %v30
  %v135 = vunpack.c.h.b16 %v30
  %v136 = vunpack.c.l.b16 %v31
  %v137 = vunpack.c.h.b16 %v31
  %v138 = vunpack.c.l.b16 %v32
  %v139 = vunpack.c.h.b16 %v32
  %v140 = vunpack.c.l.b16 %v33
  %v141 = vunpack.c.h.b16 %v33
  %v142 = vunpack.c.l.b16 %v34
  %v143 = vunpack.c.h.b16 %v34
  %v144 = vunpack.c.l.b16 %v35
  %v145 = vunpack.c.h.b16 %v35
  %v146 = vunpack.c.l.b16 %v36
  %v147 = vunpack.c.h.b16 %v36
  %v148 = vunpack.c.l.b16 %v37
  %v149 = vunpack.c.h.b16 %v37
  %v150 = vunpack.c.l.b16 %v38
  %v151 = vunpack.c.h.b16 %v38
  %v152 = vunpack.c.l.b16 %v39
  %v153 = vunpack.c.h.b16 %v39
  %v154 = vpack.c.b16 %v106, %v104
  %v155 = vpack.c.b16 %v107, %v105
  %v156 = vpack.c.b16 %v110, %v108
  %v157 = vpack.c.b16 %v111, %v109
  %v158 = vpack.c.b16 %v114, %v112
  %v159 = vpack.c.b16 %v115, %v113
  %v160 = vpack.c.b16 %v118, %v116
  %v161 = vpack.c.b16 %v119, %v117
  %v162 = vpack.c.b16 %v122, %v120
  %v163 = vpack.c.b16 %v123, %v121
  %v164 = vpack.c.b16 %v126, %v124
  %v165 = vpack.c.b16 %v127, %v125
  %v166 = vpack.c.b16 %v130, %v128
  %v167 = vpack.c.b16 %v131, %v129
  %v168 = vpack.c.b16 %v134, %v132
  %v169 = vpack.c.b16 %v135, %v133
  %v170 = vpack.c.b16 %v138, %v136
  %v171 = vpack.c.b16 %v139, %v137
  %v172 = vpack.c.b16 %v142, %v140
  %v173 = vpack.c.b16 %v143, %v141
  %v174 = vpack.c.b16 %v146, %v144
  %v175 = vpack.c.b16 %v147, %v145
  %v176 = vpack.c.b16 %v150, %v148
  %v177 = vpack.c.b16 %v151, %v149
  %v178 = vpack.c.b16 %v152, %v152
  %v179 = vpack.c.b16 %v153, %v153
  %v238 = vunpack.c.l.b16 %v40
  %v239 = vunpack.c.l.b16 %v41
  %v240 = vunpack.c.l.b16 %v42
  %v241 = vunpack.c.l.b16 %v43
  %v242 = vunpack.c.l.b16 %v44
  %v243 = vunpack.c.l.b16 %v45
  %v244 = vunpack.c.l.b16 %v46
  %v245 = vunpack.c.l.b16 %v47
  %v246 = vunpack.c.l.b16 %v48
  %v247 = vunpack.c.l.b16 %v49
  %v248 = vunpack.c.l.b16 %v50
  %v249 = vunpack.c.l.b16 %v51
  %v250 = vunpack.c.l.b16 %v52
  %v251 = vunpack.c.l.b16 %v53
  %v252 = vunpack.c.l.b16 %v54
  %v253 = vunpack.c.l.b16 %v55
  %v254 = vunpack.c.l.b16 %v56
  %v255 = vunpack.c.l.b16 %v57
  %v256 = vunpack.c.l.b16 %v58
  %v257 = vunpack.c.l.b16 %v59
  %v258 = vunpack.c.l.b16 %v60
  %v259 = vunpack.c.l.b16 %v61
  %v260 = vunpack.c.l.b16 %v62
  %v261 = vunpack.c.l.b16 %v63
  %v262 = vunpack.c.l.b16 %v64
  %v263 = vunpack.c.l.b16 %v65
  %v264 = vunpack.c.l.b16 %v66
  %v265 = vunpack.c.l.b16 %v67
  %v266 = vunpack.c.l.b16 %v68
  %v267 = vunpack.c.l.b16 %v69
  %v268 = vunpack.c.l.b16 %v70
  %v269 = vunpack.c.l.b16 %v71
  %v270 = vpack.c.b16 %v239, %v238
  %v271 = vpack.c.b16 %v241, %v240
  %v272 = vpack.c.b16 %v243, %v242
  %v273 = vpack.c.b16 %v245, %v244
  %v274 = vpack.c.b16 %v247, %v246
  %v275 = vpack.c.b16 %v249, %v248
  %v276 = vpack.c.b16 %v251, %v250
  %v277 = vpack.c.b16 %v253, %v252
  %v278 = vpack.c.b16 %v255, %v254
  %v279 = vpack.c.b16 %v257, %v256
  %v280 = vpack.c.b16 %v259, %v258
  %v281 = vpack.c.b16 %v261, %v260
  %v282 = vpack.c.b16 %v263, %v262
  %v283 = vpack.c.b16 %v265, %v264
  %v284 = vpack.c.b16 %v267, %v266
  %v285 = vpack.c.b16 %v269, %v268
  %302 = vmatprep.subr.bf16.mxu0 0
  %303 = vmatpush1.bf16.msra.mxu0 %v277
  %304 = vmatprep.subr.bf16.mxu0 0
  %305 = vmatpush1.bf16.msra.mxu0 %v276
  %306 = vmatprep.subr.bf16.mxu0 0
  %307 = vmatpush1.bf16.msra.mxu0 %v275
  %308 = vmatprep.subr.bf16.mxu0 0
  %309 = vmatpush1.bf16.msra.mxu0 %v274
  %310 = vmatprep.subr.bf16.mxu0 0
  %311 = vmatpush1.bf16.msra.mxu0 %v273
  %312 = vmatprep.subr.bf16.mxu0 0
  %313 = vmatpush1.bf16.msra.mxu0 %v272
  %314 = vmatprep.subr.bf16.mxu0 0
  %315 = vmatpush1.bf16.msra.mxu0 %v271
  %316 = vmatprep.subr.bf16.mxu0 0
  %317 = vmatpush1.bf16.msra.mxu0 %v270
  %318 = vmatprep.subr.bf16.mxu0 0
  %319 = vmatpush2.bf16.msra.mxu0 %v285
  %320 = vmatprep.subr.bf16.mxu0 0
  %321 = vmatpush2.bf16.msra.mxu0 %v284
  %322 = vmatprep.subr.bf16.mxu0 0
  %323 = vmatpush2.bf16.msra.mxu0 %v283
  %324 = vmatprep.subr.bf16.mxu0 0
  %325 = vmatpush2.bf16.msra.mxu0 %v282
  %326 = vmatprep.subr.bf16.mxu0 0
  %327 = vmatpush2.bf16.msra.mxu0 %v281
  %328 = vmatprep.subr.bf16.mxu0 0
  %329 = vmatpush2.bf16.msra.mxu0 %v280
  %330 = vmatprep.subr.bf16.mxu0 0
  %331 = vmatpush2.bf16.msra.mxu0 %v279
  %332 = vmatprep.subr.bf16.mxu0 0
  %333 = vmatpush2.bf16.msra.mxu0 %v278
  %334 = vmatprep.mubr.bf16.mxu0 %v155
  %335 = vmatmul.mubr.bf16.gmra.mxu0 %v154
  %v336 = vpop.f32.mrf.mxu0
  %v337 = vadd.f32 %v77, %v336
  %v338 = vpop.f32.mrf.mxu0
  %v339 = vpop.f32.mrf.mxu0
  %v340 = vadd.f32 %v77, %v339
  %v341 = vpop.f32.mrf.mxu0
  %342 = vmatprep.mubr.bf16.mxu0 %v157
  %343 = vmatmul.mubr.bf16.gmra.mxu0 %v156
  %v344 = vpop.f32.mrf.mxu0
  %v345 = vadd.f32 %v77, %v344
  %v346 = vpop.f32.mrf.mxu0
  %v347 = vpop.f32.mrf.mxu0
  %v348 = vadd.f32 %v77, %v347
  %v349 = vpop.f32.mrf.mxu0
  %350 = vmatprep.mubr.bf16.mxu0 %v159
  %351 = vmatmul.mubr.bf16.gmra.mxu0 %v158
  %v352 = vpop.f32.mrf.mxu0
  %v353 = vadd.f32 %v77, %v352
  %v354 = vpop.f32.mrf.mxu0
  %v355 = vpop.f32.mrf.mxu0
  %v356 = vadd.f32 %v77, %v355
  %v357 = vpop.f32.mrf.mxu0
  %358 = vmatprep.mubr.bf16.mxu0 %v161
  %359 = vmatmul.mubr.bf16.gmra.mxu0 %v160
  %v360 = vpop.f32.mrf.mxu0
  %v361 = vadd.f32 %v77, %v360
  %v362 = vpop.f32.mrf.mxu0
  %v363 = vpop.f32.mrf.mxu0
  %v364 = vadd.f32 %v77, %v363
  %v365 = vpop.f32.mrf.mxu0
  %366 = vmatprep.mubr.bf16.mxu0 %v163
  %367 = vmatmul.mubr.bf16.gmra.mxu0 %v162
  %v368 = vpop.f32.mrf.mxu0
  %v369 = vadd.f32 %v77, %v368
  %v370 = vpop.f32.mrf.mxu0
  %v371 = vpop.f32.mrf.mxu0
  %v372 = vadd.f32 %v77, %v371
  %v373 = vpop.f32.mrf.mxu0
  %374 = vmatprep.mubr.bf16.mxu0 %v165
  %375 = vmatmul.mubr.bf16.gmra.mxu0 %v164
  %v376 = vpop.f32.mrf.mxu0
  %v377 = vadd.f32 %v77, %v376
  %v378 = vpop.f32.mrf.mxu0
  %v379 = vpop.f32.mrf.mxu0
  %v380 = vadd.f32 %v77, %v379
  %v381 = vpop.f32.mrf.mxu0
  %382 = vmatprep.mubr.bf16.mxu0 %v167
  %383 = vmatmul.mubr.bf16.gmra.mxu0 %v166
  %v384 = vpop.f32.mrf.mxu0
  %v385 = vadd.f32 %v77, %v384
  %v386 = vpop.f32.mrf.mxu0
  %v387 = vpop.f32.mrf.mxu0
  %v388 = vadd.f32 %v77, %v387
  %v389 = vpop.f32.mrf.mxu0
  %390 = vmatprep.mubr.bf16.mxu0 %v169
  %391 = vmatmul.mubr.bf16.gmra.mxu0 %v168
  %v392 = vpop.f32.mrf.mxu0
  %v393 = vadd.f32 %v77, %v392
  %v394 = vpop.f32.mrf.mxu0
  %v395 = vpop.f32.mrf.mxu0
  %v396 = vadd.f32 %v77, %v395
  %v397 = vpop.f32.mrf.mxu0
  %398 = vmatprep.mubr.bf16.mxu0 %v171
  %399 = vmatmul.mubr.bf16.gmra.mxu0 %v170
  %v400 = vpop.f32.mrf.mxu0
  %v401 = vadd.f32 %v77, %v400
  %v402 = vpop.f32.mrf.mxu0
  %v403 = vpop.f32.mrf.mxu0
  %v404 = vadd.f32 %v77, %v403
  %v405 = vpop.f32.mrf.mxu0
  %406 = vmatprep.mubr.bf16.mxu0 %v173
  %407 = vmatmul.mubr.bf16.gmra.mxu0 %v172
  %v408 = vpop.f32.mrf.mxu0
  %v409 = vadd.f32 %v77, %v408
  %v410 = vpop.f32.mrf.mxu0
  %v411 = vpop.f32.mrf.mxu0
  %v412 = vadd.f32 %v77, %v411
  %v413 = vpop.f32.mrf.mxu0
  %414 = vmatprep.mubr.bf16.mxu0 %v175
  %415 = vmatmul.mubr.bf16.gmra.mxu0 %v174
  %v416 = vpop.f32.mrf.mxu0
  %v417 = vadd.f32 %v77, %v416
  %v418 = vpop.f32.mrf.mxu0
  %v419 = vpop.f32.mrf.mxu0
  %v420 = vadd.f32 %v77, %v419
  %v421 = vpop.f32.mrf.mxu0
  %422 = vmatprep.mubr.bf16.mxu0 %v177
  %423 = vmatmul.mubr.bf16.gmra.mxu0 %v176
  %v424 = vpop.f32.mrf.mxu0
  %v425 = vadd.f32 %v77, %v424
  %v426 = vpop.f32.mrf.mxu0
  %v427 = vpop.f32.mrf.mxu0
  %v428 = vadd.f32 %v77, %v427
  %v429 = vpop.f32.mrf.mxu0
  %430 = vmatprep.mubr.bf16.mxu0 %v179
  %431 = vmatmul.mubr.bf16.gmra.mxu0 %v178
  %v432 = vpop.f32.mrf.mxu0
  %v433 = vadd.f32 %v77, %v432
  %v434 = vpop.f32.mrf.mxu0
  %v435 = vpop.f32.mrf.mxu0
  %v436 = vpop.f32.mrf.mxu0
  %437 = vdwg.mxu0
  %vm438 = vcmask 64512
  %v439 = vsel %vm438, %v337, 0.0
  %v440 = vsel %vm438, %v340, 0.0
  %v441 = vadd.f32 %v439, %v440
  %v442 = vsel %vm438, %v345, 0.0
  %v443 = vadd.f32 %v441, %v442
  %v444 = vsel %vm438, %v348, 0.0
  %v445 = vadd.f32 %v443, %v444
  %v446 = vsel %vm438, %v353, 0.0
  %v447 = vadd.f32 %v445, %v446
  %v448 = vsel %vm438, %v356, 0.0
  %v449 = vadd.f32 %v447, %v448
  %v450 = vsel %vm438, %v361, 0.0
  %v451 = vadd.f32 %v449, %v450
  %v452 = vsel %vm438, %v364, 0.0
  %v453 = vadd.f32 %v451, %v452
  %v454 = vsel %vm438, %v369, 0.0
  %v455 = vadd.f32 %v453, %v454
  %v456 = vsel %vm438, %v372, 0.0
  %v457 = vadd.f32 %v455, %v456
  %v458 = vsel %vm438, %v377, 0.0
  %v459 = vadd.f32 %v457, %v458
  %v460 = vsel %vm438, %v380, 0.0
  %v461 = vadd.f32 %v459, %v460
  %v462 = vsel %vm438, %v385, 0.0
  %v463 = vadd.f32 %v461, %v462
  %v464 = vsel %vm438, %v388, 0.0
  %v465 = vadd.f32 %v463, %v464
  %v466 = vsel %vm438, %v393, 0.0
  %v467 = vadd.f32 %v465, %v466
  %v468 = vsel %vm438, %v396, 0.0
  %v469 = vadd.f32 %v467, %v468
  %v470 = vsel %vm438, %v401, 0.0
  %v471 = vadd.f32 %v469, %v470
  %v472 = vsel %vm438, %v404, 0.0
  %v473 = vadd.f32 %v471, %v472
  %v474 = vsel %vm438, %v409, 0.0
  %v475 = vadd.f32 %v473, %v474
  %v476 = vsel %vm438, %v412, 0.0
  %v477 = vadd.f32 %v475, %v476
  %v478 = vsel %vm438, %v417, 0.0
  %v479 = vadd.f32 %v477, %v478
  %v480 = vsel %vm438, %v420, 0.0
  %v481 = vadd.f32 %v479, %v480
  %v482 = vsel %vm438, %v425, 0.0
  %v483 = vadd.f32 %v481, %v482
  %v484 = vsel %vm438, %v428, 0.0
  %v485 = vadd.f32 %v483, %v484
  %v486 = vsel %vm438, %v433, 0.0
  %v487 = vadd.f32 %v485, %v486
  %v488 = vrot.slane %v487, 4
  %v489 = vadd.f32 %v487, %v488
  %v490 = vrot.slane %v489, 2
  %v491 = vadd.f32 %v489, %v490
  %v492 = vrot.slane %v491, 1
  %v493 = vadd.f32 %v491, %v492
  %v494 = vmul.f32 %v493, 0.005
  %v495 = vsub.f32 %v337, %v494
  %v496 = vsub.f32 %v340, %v494
  %v497 = vsub.f32 %v345, %v494
  %v498 = vsub.f32 %v348, %v494
  %v499 = vsub.f32 %v353, %v494
  %v500 = vsub.f32 %v356, %v494
  %v501 = vsub.f32 %v361, %v494
  %v502 = vsub.f32 %v364, %v494
  %v503 = vsub.f32 %v369, %v494
  %v504 = vsub.f32 %v372, %v494
  %v505 = vsub.f32 %v377, %v494
  %v506 = vsub.f32 %v380, %v494
  %v507 = vsub.f32 %v385, %v494
  %v508 = vsub.f32 %v388, %v494
  %v509 = vsub.f32 %v393, %v494
  %v510 = vsub.f32 %v396, %v494
  %v511 = vsub.f32 %v401, %v494
  %v512 = vsub.f32 %v404, %v494
  %v513 = vsub.f32 %v409, %v494
  %v514 = vsub.f32 %v412, %v494
  %v515 = vsub.f32 %v417, %v494
  %v516 = vsub.f32 %v420, %v494
  %v517 = vsub.f32 %v425, %v494
  %v518 = vsub.f32 %v428, %v494
  %v519 = vsub.f32 %v433, %v494
  %v520 = vmul.f32 %v495, %v495
  %v521 = vmul.f32 %v496, %v496
  %v522 = vmul.f32 %v497, %v497
  %v523 = vmul.f32 %v498, %v498
  %v524 = vmul.f32 %v499, %v499
  %v525 = vmul.f32 %v500, %v500
  %v526 = vmul.f32 %v501, %v501
  %v527 = vmul.f32 %v502, %v502
  %v528 = vmul.f32 %v503, %v503
  %v529 = vmul.f32 %v504, %v504
  %v530 = vmul.f32 %v505, %v505
  %v531 = vmul.f32 %v506, %v506
  %v532 = vmul.f32 %v507, %v507
  %v533 = vmul.f32 %v508, %v508
  %v534 = vmul.f32 %v509, %v509
  %v535 = vmul.f32 %v510, %v510
  %v536 = vmul.f32 %v511, %v511
  %v537 = vmul.f32 %v512, %v512
  %v538 = vmul.f32 %v513, %v513
  %v539 = vmul.f32 %v514, %v514
  %v540 = vmul.f32 %v515, %v515
  %v541 = vmul.f32 %v516, %v516
  %v542 = vmul.f32 %v517, %v517
  %v543 = vmul.f32 %v518, %v518
  %v544 = vmul.f32 %v519, %v519
  %v545 = vsel %vm438, %v520, 0.0
  %v546 = vsel %vm438, %v521, 0.0
  %v547 = vadd.f32 %v545, %v546
  %v548 = vsel %vm438, %v522, 0.0
  %v549 = vadd.f32 %v547, %v548
  %v550 = vsel %vm438, %v523, 0.0
  %v551 = vadd.f32 %v549, %v550
  %v552 = vsel %vm438, %v524, 0.0
  %v553 = vadd.f32 %v551, %v552
  %v554 = vsel %vm438, %v525, 0.0
  %v555 = vadd.f32 %v553, %v554
  %v556 = vsel %vm438, %v526, 0.0
  %v557 = vadd.f32 %v555, %v556
  %v558 = vsel %vm438, %v527, 0.0
  %v559 = vadd.f32 %v557, %v558
  %v560 = vsel %vm438, %v528, 0.0
  %v561 = vadd.f32 %v559, %v560
  %v562 = vsel %vm438, %v529, 0.0
  %v563 = vadd.f32 %v561, %v562
  %v564 = vsel %vm438, %v530, 0.0
  %v565 = vadd.f32 %v563, %v564
  %v566 = vsel %vm438, %v531, 0.0
  %v567 = vadd.f32 %v565, %v566
  %v568 = vsel %vm438, %v532, 0.0
  %v569 = vadd.f32 %v567, %v568
  %v570 = vsel %vm438, %v533, 0.0
  %v571 = vadd.f32 %v569, %v570
  %v572 = vsel %vm438, %v534, 0.0
  %v573 = vadd.f32 %v571, %v572
  %v574 = vsel %vm438, %v535, 0.0
  %v575 = vadd.f32 %v573, %v574
  %v576 = vsel %vm438, %v536, 0.0
  %v577 = vadd.f32 %v575, %v576
  %v578 = vsel %vm438, %v537, 0.0
  %v579 = vadd.f32 %v577, %v578
  %v580 = vsel %vm438, %v538, 0.0
  %v581 = vadd.f32 %v579, %v580
  %v582 = vsel %vm438, %v539, 0.0
  %v583 = vadd.f32 %v581, %v582
  %v584 = vsel %vm438, %v540, 0.0
  %v585 = vadd.f32 %v583, %v584
  %v586 = vsel %vm438, %v541, 0.0
  %v587 = vadd.f32 %v585, %v586
  %v588 = vsel %vm438, %v542, 0.0
  %v589 = vadd.f32 %v587, %v588
  %v590 = vsel %vm438, %v543, 0.0
  %v591 = vadd.f32 %v589, %v590
  %v592 = vsel %vm438, %v544, 0.0
  %v593 = vadd.f32 %v591, %v592
  %v594 = vrot.slane %v593, 4
  %v595 = vadd.f32 %v593, %v594
  %v596 = vrot.slane %v595, 2
  %v597 = vadd.f32 %v595, %v596
  %v598 = vrot.slane %v597, 1
  %v599 = vadd.f32 %v597, %v598
  %v600 = vmul.f32 %v599, 0.005
  %v601 = vadd.f32 %v600, 1e-05
  %v602 = vrsqrt.pop %v601
  %v603 = vmul.f32 %v495, %v602
  %v604 = vmul.f32 %v496, %v602
  %v605 = vmul.f32 %v497, %v602
  %v606 = vmul.f32 %v498, %v602
  %v607 = vmul.f32 %v499, %v602
  %v608 = vmul.f32 %v500, %v602
  %v609 = vmul.f32 %v501, %v602
  %v610 = vmul.f32 %v502, %v602
  %v611 = vmul.f32 %v503, %v602
  %v612 = vmul.f32 %v504, %v602
  %v613 = vmul.f32 %v505, %v602
  %v614 = vmul.f32 %v506, %v602
  %v615 = vmul.f32 %v507, %v602
  %v616 = vmul.f32 %v508, %v602
  %v617 = vmul.f32 %v509, %v602
  %v618 = vmul.f32 %v510, %v602
  %v619 = vmul.f32 %v511, %v602
  %v620 = vmul.f32 %v512, %v602
  %v621 = vmul.f32 %v513, %v602
  %v622 = vmul.f32 %v514, %v602
  %v623 = vmul.f32 %v515, %v602
  %v624 = vmul.f32 %v516, %v602
  %v625 = vmul.f32 %v517, %v602
  %v626 = vmul.f32 %v518, %v602
  %v627 = vmul.f32 %v519, %v602
  %vm628 = vcmp.ge.f32.partialorder %v603, 0.0
  %vm629 = vcmp.ge.f32.partialorder %v604, 0.0
  %vm630 = vcmp.ge.f32.partialorder %v605, 0.0
  %vm631 = vcmp.ge.f32.partialorder %v606, 0.0
  %vm632 = vcmp.ge.f32.partialorder %v607, 0.0
  %vm633 = vcmp.ge.f32.partialorder %v608, 0.0
  %vm634 = vcmp.ge.f32.partialorder %v609, 0.0
  %vm635 = vcmp.ge.f32.partialorder %v610, 0.0
  %vm636 = vcmp.ge.f32.partialorder %v611, 0.0
  %vm637 = vcmp.ge.f32.partialorder %v612, 0.0
  %vm638 = vcmp.ge.f32.partialorder %v613, 0.0
  %vm639 = vcmp.ge.f32.partialorder %v614, 0.0
  %vm640 = vcmp.ge.f32.partialorder %v615, 0.0
  %vm641 = vcmp.ge.f32.partialorder %v616, 0.0
  %vm642 = vcmp.ge.f32.partialorder %v617, 0.0
  %vm643 = vcmp.ge.f32.partialorder %v618, 0.0
  %vm644 = vcmp.ge.f32.partialorder %v619, 0.0
  %vm645 = vcmp.ge.f32.partialorder %v620, 0.0
  %vm646 = vcmp.ge.f32.partialorder %v621, 0.0
  %vm647 = vcmp.ge.f32.partialorder %v622, 0.0
  %vm648 = vcmp.ge.f32.partialorder %v623, 0.0
  %vm649 = vcmp.ge.f32.partialorder %v624, 0.0
  %vm650 = vcmp.ge.f32.partialorder %v625, 0.0
  %vm651 = vcmp.ge.f32.partialorder %v626, 0.0
  %vm652 = vcmp.ge.f32.partialorder %v627, 0.0
  %v653 = vmul.f32 %v603, 0.01
  %v654 = vmul.f32 %v604, 0.01
  %v655 = vmul.f32 %v605, 0.01
  %v656 = vmul.f32 %v606, 0.01
  %v657 = vmul.f32 %v607, 0.01
  %v658 = vmul.f32 %v608, 0.01
  %v659 = vmul.f32 %v609, 0.01
  %v660 = vmul.f32 %v610, 0.01
  %v661 = vmul.f32 %v611, 0.01
  %v662 = vmul.f32 %v612, 0.01
  %v663 = vmul.f32 %v613, 0.01
  %v664 = vmul.f32 %v614, 0.01
  %v665 = vmul.f32 %v615, 0.01
  %v666 = vmul.f32 %v616, 0.01
  %v667 = vmul.f32 %v617, 0.01
  %v668 = vmul.f32 %v618, 0.01
  %v669 = vmul.f32 %v619, 0.01
  %v670 = vmul.f32 %v620, 0.01
  %v671 = vmul.f32 %v621, 0.01
  %v672 = vmul.f32 %v622, 0.01
  %v673 = vmul.f32 %v623, 0.01
  %v674 = vmul.f32 %v624, 0.01
  %v675 = vmul.f32 %v625, 0.01
  %v676 = vmul.f32 %v626, 0.01
  %v677 = vmul.f32 %v627, 0.01
  %v678 = vsel %vm628, %v603, %v653
  %v679 = vsel %vm629, %v604, %v654
  %v680 = vsel %vm630, %v605, %v655
  %v681 = vsel %vm631, %v606, %v656
  %v682 = vsel %vm632, %v607, %v657
  %v683 = vsel %vm633, %v608, %v658
  %v684 = vsel %vm634, %v609, %v659
  %v685 = vsel %vm635, %v610, %v660
  %v686 = vsel %vm636, %v611, %v661
  %v687 = vsel %vm637, %v612, %v662
  %v688 = vsel %vm638, %v613, %v663
  %v689 = vsel %vm639, %v614, %v664
  %v690 = vsel %vm640, %v615, %v665
  %v691 = vsel %vm641, %v616, %v666
  %v692 = vsel %vm642, %v617, %v667
  %v693 = vsel %vm643, %v618, %v668
  %v694 = vsel %vm644, %v619, %v669
  %v695 = vsel %vm645, %v620, %v670
  %v696 = vsel %vm646, %v621, %v671
  %v697 = vsel %vm647, %v622, %v672
  %v698 = vsel %vm648, %v623, %v673
  %v699 = vsel %vm649, %v624, %v674
  %v700 = vsel %vm650, %v625, %v675
  %v701 = vsel %vm651, %v626, %v676
  %v702 = vsel %vm652, %v627, %v677
  %703 = vst.msk [vmem:[%s3] sm:$0xff] %vm438, %v678
  %704 = vst.msk [vmem:[%s3 + $0x8] sm:$0xff] %vm438, %v679
  %705 = vst.msk [vmem:[%s3 + $0x10] sm:$0xff] %vm438, %v680
  %706 = vst.msk [vmem:[%s3 + $0x18] sm:$0xff] %vm438, %v681
  %707 = vst.msk [vmem:[%s3 + $0x20] sm:$0xff] %vm438, %v682
  %708 = vst.msk [vmem:[%s3 + $0x28] sm:$0xff] %vm438, %v683
  %709 = vst.msk [vmem:[%s3 + $0x30] sm:$0xff] %vm438, %v684
  %710 = vst.msk [vmem:[%s3 + $0x38] sm:$0xff] %vm438, %v685
  %711 = vst.msk [vmem:[%s3 + $0x40] sm:$0xff] %vm438, %v686
  %712 = vst.msk [vmem:[%s3 + $0x48] sm:$0xff] %vm438, %v687
  %713 = vst.msk [vmem:[%s3 + $0x50] sm:$0xff] %vm438, %v688
  %714 = vst.msk [vmem:[%s3 + $0x58] sm:$0xff] %vm438, %v689
  %715 = vst.msk [vmem:[%s3 + $0x60] sm:$0xff] %vm438, %v690
  %716 = vst.msk [vmem:[%s3 + $0x68] sm:$0xff] %vm438, %v691
  %717 = vst.msk [vmem:[%s3 + $0x70] sm:$0xff] %vm438, %v692
  %718 = vst.msk [vmem:[%s3 + $0x78] sm:$0xff] %vm438, %v693
  %719 = vst.msk [vmem:[%s3 + $0x80] sm:$0xff] %vm438, %v694
  %720 = vst.msk [vmem:[%s3 + $0x88] sm:$0xff] %vm438, %v695
  %721 = vst.msk [vmem:[%s3 + $0x90] sm:$0xff] %vm438, %v696
  %722 = vst.msk [vmem:[%s3 + $0x98] sm:$0xff] %vm438, %v697
  %723 = vst.msk [vmem:[%s3 + $0xa0] sm:$0xff] %vm438, %v698
  %724 = vst.msk [vmem:[%s3 + $0xa8] sm:$0xff] %vm438, %v699
  %725 = vst.msk [vmem:[%s3 + $0xb0] sm:$0xff] %vm438, %v700
  %726 = vst.msk [vmem:[%s3 + $0xb8] sm:$0xff] %vm438, %v701
  %727 = vst.msk [vmem:[%s3 + $0xc0] sm:$0xff] %vm438, %v702
  // Predicated region
  $region14: #{_lambda_.8} parent=0 // pred_check
    _
  $region15: #{_lambda_.8} parent=0 // pred_check_branch
    %729 = sbr.rel (0) target = $region17
  $region16: #{_lambda_.8} parent=0 // pred_region
    _
  $region17: #{_lambda_.8} parent=0 // pred_fallthru
    _
  // Predicated region
  $region18: #{_lambda_.8} parent=0 // pred_check
    _
  $region19: #{_lambda_.8} parent=0 // pred_check_branch
    %731 = sbr.rel (0) target = $region21
  $region20: #{_lambda_.8} parent=0 // pred_region
    _
  $region21: #{_lambda_.8} parent=0 // pred_fallthru
    _

// kernel: _lambda_.9
$region0: #{_lambda_.9}
  #allocation0 [shape = 'u32[]', space=smem, size = 0x4, offset = 0x4, fixed_abs, tag = 'smem constant byte address 0x4 - core index']
  #allocation1 [shape = 'u32[144,128]{1,0:T(1,128)}', space=vmem, size = 0x12000, scoped, tag = 'internal scratch']
  %s0 = inlined_call_operand.vmem [shape: bf16[338,128], index: 0, kind: input, shape index: {}]
  %s1 = inlined_call_operand.vmem [shape: bf16[128,3], index: 1, kind: input, shape index: {}]
  %s2 = inlined_call_operand.vmem [shape: f32[1,3], index: 2, kind: input, shape index: {}]
  %s3 = inlined_call_operand.vmem [shape: f32[338,3], index: 3, kind: output, shape index: {}]
  %s4 = sld [smem:[#allocation0]]
  $region22: #{_lambda_.9} parent=0
    _
  %s6 = ssub.s32 1, %s4
  %s7 = scalar_select 0, %s6, %s4
  // Predicated region
  $region2: #{_lambda_.9} parent=0 // pred_check
    _
  $region3: #{_lambda_.9} parent=0 // pred_check_branch
    %9 = sbr.rel (0) target = $region5
  $region4: #{_lambda_.9} parent=0 // pred_region
    _
  $region5: #{_lambda_.9} parent=0 // pred_fallthru
    _
  // Predicated region
  $region6: #{_lambda_.9} parent=0 // pred_check
    _
  $region7: #{_lambda_.9} parent=0 // pred_check_branch
    %11 = sbr.rel (0) target = $region9
  $region8: #{_lambda_.9} parent=0 // pred_region
    _
  $region9: #{_lambda_.9} parent=0 // pred_fallthru
    _
  // Predicated region
  $region10: #{_lambda_.9} parent=0 // pred_check
    _
  $region11: #{_lambda_.9} parent=0 // pred_check_branch
    %13 = sbr.rel (0) target = $region13
  $region12: #{_lambda_.9} parent=0 // pred_region
    _
  $region13: #{_lambda_.9} parent=0 // pred_fallthru
    _
  %v15 = vld [vmem:[%s0] sm:$0xf]
  %v16 = vld [vmem:[%s0 + $0x4] sm:$0xf]
  %v17 = vld [vmem:[%s0 + $0x8] sm:$0xf]
  %v18 = vld [vmem:[%s0 + $0xc] sm:$0xf]
  %v19 = vld [vmem:[%s0 + $0x10] sm:$0xf]
  %v20 = vld [vmem:[%s0 + $0x14] sm:$0xf]
  %v21 = vld [vmem:[%s0 + $0x18] sm:$0xf]
  %v22 = vld [vmem:[%s0 + $0x1c] sm:$0xf]
  %v23 = vld [vmem:[%s0 + $0x20] sm:$0xf]
  %v24 = vld [vmem:[%s0 + $0x24] sm:$0xf]
  %v25 = vld [vmem:[%s0 + $0x28] sm:$0xf]
  %v26 = vld [vmem:[%s0 + $0x2c] sm:$0xf]
  %v27 = vld [vmem:[%s0 + $0x30] sm:$0xf]
  %v28 = vld [vmem:[%s0 + $0x34] sm:$0xf]
  %v29 = vld [vmem:[%s0 + $0x38] sm:$0xf]
  %v30 = vld [vmem:[%s0 + $0x3c] sm:$0xf]
  %v31 = vld [vmem:[%s0 + $0x40] sm:$0xf]
  %v32 = vld [vmem:[%s0 + $0x44] sm:$0xf]
  %v33 = vld [vmem:[%s0 + $0x48] sm:$0xf]
  %v34 = vld [vmem:[%s0 + $0x4c] sm:$0xf]
  %v35 = vld [vmem:[%s0 + $0x50] sm:$0xf]
  %v36 = vld [vmem:[%s0 + $0x54] sm:$0xf]
  %v37 = vld [vmem:[%s0 + $0x58] sm:$0xf]
  %v38 = vld [vmem:[%s0 + $0x5c] sm:$0xf]
  %v39 = vld [vmem:[%s0 + $0x60] sm:$0xf]
  %v40 = vld [vmem:[%s0 + $0x64] sm:$0xf]
  %v41 = vld [vmem:[%s0 + $0x68] sm:$0xf]
  %v42 = vld [vmem:[%s0 + $0x6c] sm:$0xf]
  %v43 = vld [vmem:[%s0 + $0x70] sm:$0xf]
  %v44 = vld [vmem:[%s0 + $0x74] sm:$0xf]
  %v45 = vld [vmem:[%s0 + $0x78] sm:$0xf]
  %v46 = vld [vmem:[%s0 + $0x7c] sm:$0xf]
  %v47 = vld [vmem:[%s0 + $0x80] sm:$0xf]
  %v48 = vld [vmem:[%s0 + $0x84] sm:$0xf]
  %v49 = vld [vmem:[%s0 + $0x88] sm:$0xf]
  %v50 = vld [vmem:[%s0 + $0x8c] sm:$0xf]
  %v51 = vld [vmem:[%s0 + $0x90] sm:$0xf]
  %v52 = vld [vmem:[%s0 + $0x94] sm:$0xf]
  %v53 = vld [vmem:[%s0 + $0x98] sm:$0xf]
  %v54 = vld [vmem:[%s0 + $0x9c] sm:$0xf]
  %v55 = vld [vmem:[%s0 + $0xa0] sm:$0xf]
  %v56 = vld [vmem:[%s0 + $0xa4] sm:$0xf]
  %v57 = vld [vmem:[%s0 + $0xa8] sm:$0x1]
  %v58 = vld [vmem:[%s1] sm:$0xf]
  %v59 = vld [vmem:[%s1 + $0x4] sm:$0xf]
  %v60 = vld [vmem:[%s1 + $0x8] sm:$0xf]
  %v61 = vld [vmem:[%s1 + $0xc] sm:$0xf]
  %v62 = vld [vmem:[%s1 + $0x10] sm:$0xf]
  %v63 = vld [vmem:[%s1 + $0x14] sm:$0xf]
  %v64 = vld [vmem:[%s1 + $0x18] sm:$0xf]
  %v65 = vld [vmem:[%s1 + $0x1c] sm:$0xf]
  %v66 = vld [vmem:[%s1 + $0x20] sm:$0xf]
  %v67 = vld [vmem:[%s1 + $0x24] sm:$0xf]
  %v68 = vld [vmem:[%s1 + $0x28] sm:$0xf]
  %v69 = vld [vmem:[%s1 + $0x2c] sm:$0xf]
  %v70 = vld [vmem:[%s1 + $0x30] sm:$0xf]
  %v71 = vld [vmem:[%s1 + $0x34] sm:$0xf]
  %v72 = vld [vmem:[%s1 + $0x38] sm:$0xf]
  %v73 = vld [vmem:[%s1 + $0x3c] sm:$0xf]
  %v74 = vld [vmem:[%s2] sm:$0x1]
  %v76 = vlaneseq
  %v77 = vshrl.u32 %v76, 7
  %v78 = vsub.s32 0, %v77
  %v79 = vrot.slane %v74, %v78
  %v124 = vunpack.c.l.b16 %v15
  %v125 = vunpack.c.l.b16 %v16
  %v126 = vunpack.c.l.b16 %v17
  %v127 = vunpack.c.l.b16 %v18
  %v128 = vunpack.c.l.b16 %v19
  %v129 = vunpack.c.l.b16 %v20
  %v130 = vunpack.c.l.b16 %v21
  %v131 = vunpack.c.l.b16 %v22
  %v132 = vunpack.c.l.b16 %v23
  %v133 = vunpack.c.l.b16 %v24
  %v134 = vunpack.c.l.b16 %v25
  %v135 = vunpack.c.l.b16 %v26
  %v136 = vunpack.c.l.b16 %v27
  %v137 = vunpack.c.l.b16 %v28
  %v138 = vunpack.c.l.b16 %v29
  %v139 = vunpack.c.l.b16 %v30
  %v140 = vunpack.c.l.b16 %v31
  %v141 = vunpack.c.l.b16 %v32
  %v142 = vunpack.c.l.b16 %v33
  %v143 = vunpack.c.l.b16 %v34
  %v144 = vunpack.c.l.b16 %v35
  %v145 = vunpack.c.l.b16 %v36
  %v146 = vunpack.c.l.b16 %v37
  %v147 = vunpack.c.l.b16 %v38
  %v148 = vunpack.c.l.b16 %v39
  %v149 = vunpack.c.l.b16 %v40
  %v150 = vunpack.c.l.b16 %v41
  %v151 = vunpack.c.l.b16 %v42
  %v152 = vunpack.c.l.b16 %v43
  %v153 = vunpack.c.l.b16 %v44
  %v154 = vunpack.c.l.b16 %v45
  %v155 = vunpack.c.l.b16 %v46
  %v156 = vunpack.c.l.b16 %v47
  %v157 = vunpack.c.l.b16 %v48
  %v158 = vunpack.c.l.b16 %v49
  %v159 = vunpack.c.l.b16 %v50
  %v160 = vunpack.c.l.b16 %v51
  %v161 = vunpack.c.l.b16 %v52
  %v162 = vunpack.c.l.b16 %v53
  %v163 = vunpack.c.l.b16 %v54
  %v164 = vunpack.c.l.b16 %v55
  %v165 = vunpack.c.l.b16 %v56
  %v166 = vunpack.c.l.b16 %v57
  %v167 = vpack.c.b16 %v125, %v124
  %v168 = vpack.c.b16 %v127, %v126
  %v169 = vpack.c.b16 %v129, %v128
  %v170 = vpack.c.b16 %v131, %v130
  %v171 = vpack.c.b16 %v133, %v132
  %v172 = vpack.c.b16 %v135, %v134
  %v173 = vpack.c.b16 %v137, %v136
  %v174 = vpack.c.b16 %v139, %v138
  %v175 = vpack.c.b16 %v141, %v140
  %v176 = vpack.c.b16 %v143, %v142
  %v177 = vpack.c.b16 %v145, %v144
  %v178 = vpack.c.b16 %v147, %v146
  %v179 = vpack.c.b16 %v149, %v148
  %v180 = vpack.c.b16 %v151, %v150
  %v181 = vpack.c.b16 %v153, %v152
  %v182 = vpack.c.b16 %v155, %v154
  %v183 = vpack.c.b16 %v157, %v156
  %v184 = vpack.c.b16 %v159, %v158
  %v185 = vpack.c.b16 %v161, %v160
  %v186 = vpack.c.b16 %v163, %v162
  %v187 = vpack.c.b16 %v165, %v164
  %v188 = vpack.c.b16 %v166, %v166
  %v227 = vunpack.c.l.b16 %v58
  %v228 = vunpack.c.l.b16 %v59
  %v229 = vunpack.c.l.b16 %v60
  %v230 = vunpack.c.l.b16 %v61
  %v231 = vunpack.c.l.b16 %v62
  %v232 = vunpack.c.l.b16 %v63
  %v233 = vunpack.c.l.b16 %v64
  %v234 = vunpack.c.l.b16 %v65
  %v235 = vunpack.c.l.b16 %v66
  %v236 = vunpack.c.l.b16 %v67
  %v237 = vunpack.c.l.b16 %v68
  %v238 = vunpack.c.l.b16 %v69
  %v239 = vunpack.c.l.b16 %v70
  %v240 = vunpack.c.l.b16 %v71
  %v241 = vunpack.c.l.b16 %v72
  %v242 = vunpack.c.l.b16 %v73
  %v243 = vpack.c.b16 %v228, %v227
  %v244 = vpack.c.b16 %v230, %v229
  %v245 = vpack.c.b16 %v232, %v231
  %v246 = vpack.c.b16 %v234, %v233
  %v247 = vpack.c.b16 %v236, %v235
  %v248 = vpack.c.b16 %v238, %v237
  %v249 = vpack.c.b16 %v240, %v239
  %v250 = vpack.c.b16 %v242, %v241
  %259 = vmatprep.subr.bf16.mxu0 0
  %260 = vmatpush1.bf16.msra.mxu0 %v250
  %261 = vmatprep.subr.bf16.mxu0 0
  %262 = vmatpush1.bf16.msra.mxu0 %v249
  %263 = vmatprep.subr.bf16.mxu0 0
  %264 = vmatpush1.bf16.msra.mxu0 %v248
  %265 = vmatprep.subr.bf16.mxu0 0
  %266 = vmatpush1.bf16.msra.mxu0 %v247
  %267 = vmatprep.subr.bf16.mxu0 0
  %268 = vmatpush1.bf16.msra.mxu0 %v246
  %269 = vmatprep.subr.bf16.mxu0 0
  %270 = vmatpush1.bf16.msra.mxu0 %v245
  %271 = vmatprep.subr.bf16.mxu0 0
  %272 = vmatpush1.bf16.msra.mxu0 %v244
  %273 = vmatprep.subr.bf16.mxu0 0
  %274 = vmatpush1.bf16.msra.mxu0 %v243
  %275 = vmatprep.subr.bf16.mxu0 0
  %276 = vmatpush2.bf16.msra.mxu0 0
  %277 = vmatprep.subr.bf16.mxu0 0
  %278 = vmatpush2.bf16.msra.mxu0 0
  %279 = vmatprep.subr.bf16.mxu0 0
  %280 = vmatpush2.bf16.msra.mxu0 0
  %281 = vmatprep.subr.bf16.mxu0 0
  %282 = vmatpush2.bf16.msra.mxu0 0
  %283 = vmatprep.subr.bf16.mxu0 0
  %284 = vmatpush2.bf16.msra.mxu0 0
  %285 = vmatprep.subr.bf16.mxu0 0
  %286 = vmatpush2.bf16.msra.mxu0 0
  %287 = vmatprep.subr.bf16.mxu0 0
  %288 = vmatpush2.bf16.msra.mxu0 0
  %289 = vmatprep.subr.bf16.mxu0 0
  %290 = vmatpush2.bf16.msra.mxu0 0
  %291 = vmatprep.mubr.bf16.mxu0 0
  %292 = vmatmul.mubr.bf16.gmra.mxu0 %v167
  %v293 = vpop.f32.mrf.mxu0
  %v294 = vadd.f32 %v79, %v293
  %v295 = vpop.f32.mrf.mxu0
  %v296 = vpop.f32.mrf.mxu0
  %v297 = vadd.f32 %v79, %v296
  %v298 = vpop.f32.mrf.mxu0
  %299 = vmatprep.mubr.bf16.mxu0 0
  %300 = vmatmul.mubr.bf16.gmra.mxu0 %v168
  %v301 = vpop.f32.mrf.mxu0
  %v302 = vadd.f32 %v79, %v301
  %v303 = vpop.f32.mrf.mxu0
  %v304 = vpop.f32.mrf.mxu0
  %v305 = vadd.f32 %v79, %v304
  %v306 = vpop.f32.mrf.mxu0
  %307 = vmatprep.mubr.bf16.mxu0 0
  %308 = vmatmul.mubr.bf16.gmra.mxu0 %v169
  %v309 = vpop.f32.mrf.mxu0
  %v310 = vadd.f32 %v79, %v309
  %v311 = vpop.f32.mrf.mxu0
  %v312 = vpop.f32.mrf.mxu0
  %v313 = vadd.f32 %v79, %v312
  %v314 = vpop.f32.mrf.mxu0
  %315 = vmatprep.mubr.bf16.mxu0 0
  %316 = vmatmul.mubr.bf16.gmra.mxu0 %v170
  %v317 = vpop.f32.mrf.mxu0
  %v318 = vadd.f32 %v79, %v317
  %v319 = vpop.f32.mrf.mxu0
  %v320 = vpop.f32.mrf.mxu0
  %v321 = vadd.f32 %v79, %v320
  %v322 = vpop.f32.mrf.mxu0
  %323 = vmatprep.mubr.bf16.mxu0 0
  %324 = vmatmul.mubr.bf16.gmra.mxu0 %v171
  %v325 = vpop.f32.mrf.mxu0
  %v326 = vadd.f32 %v79, %v325
  %v327 = vpop.f32.mrf.mxu0
  %v328 = vpop.f32.mrf.mxu0
  %v329 = vadd.f32 %v79, %v328
  %v330 = vpop.f32.mrf.mxu0
  %331 = vmatprep.mubr.bf16.mxu0 0
  %332 = vmatmul.mubr.bf16.gmra.mxu0 %v172
  %v333 = vpop.f32.mrf.mxu0
  %v334 = vadd.f32 %v79, %v333
  %v335 = vpop.f32.mrf.mxu0
  %v336 = vpop.f32.mrf.mxu0
  %v337 = vadd.f32 %v79, %v336
  %v338 = vpop.f32.mrf.mxu0
  %339 = vmatprep.mubr.bf16.mxu0 0
  %340 = vmatmul.mubr.bf16.gmra.mxu0 %v173
  %v341 = vpop.f32.mrf.mxu0
  %v342 = vadd.f32 %v79, %v341
  %v343 = vpop.f32.mrf.mxu0
  %v344 = vpop.f32.mrf.mxu0
  %v345 = vadd.f32 %v79, %v344
  %v346 = vpop.f32.mrf.mxu0
  %347 = vmatprep.mubr.bf16.mxu0 0
  %348 = vmatmul.mubr.bf16.gmra.mxu0 %v174
  %v349 = vpop.f32.mrf.mxu0
  %v350 = vadd.f32 %v79, %v349
  %v351 = vpop.f32.mrf.mxu0
  %v352 = vpop.f32.mrf.mxu0
  %v353 = vadd.f32 %v79, %v352
  %v354 = vpop.f32.mrf.mxu0
  %355 = vmatprep.mubr.bf16.mxu0 0
  %356 = vmatmul.mubr.bf16.gmra.mxu0 %v175
  %v357 = vpop.f32.mrf.mxu0
  %v358 = vadd.f32 %v79, %v357
  %v359 = vpop.f32.mrf.mxu0
  %v360 = vpop.f32.mrf.mxu0
  %v361 = vadd.f32 %v79, %v360
  %v362 = vpop.f32.mrf.mxu0
  %363 = vmatprep.mubr.bf16.mxu0 0
  %364 = vmatmul.mubr.bf16.gmra.mxu0 %v176
  %v365 = vpop.f32.mrf.mxu0
  %v366 = vadd.f32 %v79, %v365
  %v367 = vpop.f32.mrf.mxu0
  %v368 = vpop.f32.mrf.mxu0
  %v369 = vadd.f32 %v79, %v368
  %v370 = vpop.f32.mrf.mxu0
  %371 = vmatprep.mubr.bf16.mxu0 0
  %372 = vmatmul.mubr.bf16.gmra.mxu0 %v177
  %v373 = vpop.f32.mrf.mxu0
  %v374 = vadd.f32 %v79, %v373
  %v375 = vpop.f32.mrf.mxu0
  %v376 = vpop.f32.mrf.mxu0
  %v377 = vadd.f32 %v79, %v376
  %v378 = vpop.f32.mrf.mxu0
  %379 = vmatprep.mubr.bf16.mxu0 0
  %380 = vmatmul.mubr.bf16.gmra.mxu0 %v178
  %v381 = vpop.f32.mrf.mxu0
  %v382 = vadd.f32 %v79, %v381
  %v383 = vpop.f32.mrf.mxu0
  %v384 = vpop.f32.mrf.mxu0
  %v385 = vadd.f32 %v79, %v384
  %v386 = vpop.f32.mrf.mxu0
  %387 = vmatprep.mubr.bf16.mxu0 0
  %388 = vmatmul.mubr.bf16.gmra.mxu0 %v179
  %v389 = vpop.f32.mrf.mxu0
  %v390 = vadd.f32 %v79, %v389
  %v391 = vpop.f32.mrf.mxu0
  %v392 = vpop.f32.mrf.mxu0
  %v393 = vadd.f32 %v79, %v392
  %v394 = vpop.f32.mrf.mxu0
  %395 = vmatprep.mubr.bf16.mxu0 0
  %396 = vmatmul.mubr.bf16.gmra.mxu0 %v180
  %v397 = vpop.f32.mrf.mxu0
  %v398 = vadd.f32 %v79, %v397
  %v399 = vpop.f32.mrf.mxu0
  %v400 = vpop.f32.mrf.mxu0
  %v401 = vadd.f32 %v79, %v400
  %v402 = vpop.f32.mrf.mxu0
  %403 = vmatprep.mubr.bf16.mxu0 0
  %404 = vmatmul.mubr.bf16.gmra.mxu0 %v181
  %v405 = vpop.f32.mrf.mxu0
  %v406 = vadd.f32 %v79, %v405
  %v407 = vpop.f32.mrf.mxu0
  %v408 = vpop.f32.mrf.mxu0
  %v409 = vadd.f32 %v79, %v408
  %v410 = vpop.f32.mrf.mxu0
  %411 = vmatprep.mubr.bf16.mxu0 0
  %412 = vmatmul.mubr.bf16.gmra.mxu0 %v182
  %v413 = vpop.f32.mrf.mxu0
  %v414 = vadd.f32 %v79, %v413
  %v415 = vpop.f32.mrf.mxu0
  %v416 = vpop.f32.mrf.mxu0
  %v417 = vadd.f32 %v79, %v416
  %v418 = vpop.f32.mrf.mxu0
  %419 = vmatprep.mubr.bf16.mxu0 0
  %420 = vmatmul.mubr.bf16.gmra.mxu0 %v183
  %v421 = vpop.f32.mrf.mxu0
  %v422 = vadd.f32 %v79, %v421
  %v423 = vpop.f32.mrf.mxu0
  %v424 = vpop.f32.mrf.mxu0
  %v425 = vadd.f32 %v79, %v424
  %v426 = vpop.f32.mrf.mxu0
  %427 = vmatprep.mubr.bf16.mxu0 0
  %428 = vmatmul.mubr.bf16.gmra.mxu0 %v184
  %v429 = vpop.f32.mrf.mxu0
  %v430 = vadd.f32 %v79, %v429
  %v431 = vpop.f32.mrf.mxu0
  %v432 = vpop.f32.mrf.mxu0
  %v433 = vadd.f32 %v79, %v432
  %v434 = vpop.f32.mrf.mxu0
  %435 = vmatprep.mubr.bf16.mxu0 0
  %436 = vmatmul.mubr.bf16.gmra.mxu0 %v185
  %v437 = vpop.f32.mrf.mxu0
  %v438 = vadd.f32 %v79, %v437
  %v439 = vpop.f32.mrf.mxu0
  %v440 = vpop.f32.mrf.mxu0
  %v441 = vadd.f32 %v79, %v440
  %v442 = vpop.f32.mrf.mxu0
  %443 = vmatprep.mubr.bf16.mxu0 0
  %444 = vmatmul.mubr.bf16.gmra.mxu0 %v186
  %v445 = vpop.f32.mrf.mxu0
  %v446 = vadd.f32 %v79, %v445
  %v447 = vpop.f32.mrf.mxu0
  %v448 = vpop.f32.mrf.mxu0
  %v449 = vadd.f32 %v79, %v448
  %v450 = vpop.f32.mrf.mxu0
  %451 = vmatprep.mubr.bf16.mxu0 0
  %452 = vmatmul.mubr.bf16.gmra.mxu0 %v187
  %v453 = vpop.f32.mrf.mxu0
  %v454 = vadd.f32 %v79, %v453
  %v455 = vpop.f32.mrf.mxu0
  %v456 = vpop.f32.mrf.mxu0
  %v457 = vadd.f32 %v79, %v456
  %v458 = vpop.f32.mrf.mxu0
  %459 = vmatprep.mubr.bf16.mxu0 0
  %460 = vmatmul.mubr.bf16.gmra.mxu0 %v188
  %v461 = vpop.f32.mrf.mxu0
  %v462 = vadd.f32 %v79, %v461
  %v463 = vpop.f32.mrf.mxu0
  %v464 = vpop.f32.mrf.mxu0
  %v465 = vpop.f32.mrf.mxu0
  %466 = vdwg.mxu0
  %v467 = vtanh.pop %v294
  %v468 = vtanh.pop %v297
  %v469 = vtanh.pop %v302
  %v470 = vtanh.pop %v305
  %v471 = vtanh.pop %v310
  %v472 = vtanh.pop %v313
  %v473 = vtanh.pop %v318
  %v474 = vtanh.pop %v321
  %v475 = vtanh.pop %v326
  %v476 = vtanh.pop %v329
  %v477 = vtanh.pop %v334
  %v478 = vtanh.pop %v337
  %v479 = vtanh.pop %v342
  %v480 = vtanh.pop %v345
  %v481 = vtanh.pop %v350
  %v482 = vtanh.pop %v353
  %v483 = vtanh.pop %v358
  %v484 = vtanh.pop %v361
  %v485 = vtanh.pop %v366
  %v486 = vtanh.pop %v369
  %v487 = vtanh.pop %v374
  %v488 = vtanh.pop %v377
  %v489 = vtanh.pop %v382
  %v490 = vtanh.pop %v385
  %v491 = vtanh.pop %v390
  %v492 = vtanh.pop %v393
  %v493 = vtanh.pop %v398
  %v494 = vtanh.pop %v401
  %v495 = vtanh.pop %v406
  %v496 = vtanh.pop %v409
  %v497 = vtanh.pop %v414
  %v498 = vtanh.pop %v417
  %v499 = vtanh.pop %v422
  %v500 = vtanh.pop %v425
  %v501 = vtanh.pop %v430
  %v502 = vtanh.pop %v433
  %v503 = vtanh.pop %v438
  %v504 = vtanh.pop %v441
  %v505 = vtanh.pop %v446
  %v506 = vtanh.pop %v449
  %v507 = vtanh.pop %v454
  %v508 = vtanh.pop %v457
  %v509 = vtanh.pop %v462
  %vm510 = vcmask 23552
  %511 = vst.msk [vmem:[%s3] sm:$0xff] %vm510, %v467
  %512 = vst.msk [vmem:[%s3 + $0x8] sm:$0xff] %vm510, %v468
  %513 = vst.msk [vmem:[%s3 + $0x10] sm:$0xff] %vm510, %v469
  %514 = vst.msk [vmem:[%s3 + $0x18] sm:$0xff] %vm510, %v470
  %515 = vst.msk [vmem:[%s3 + $0x20] sm:$0xff] %vm510, %v471
  %516 = vst.msk [vmem:[%s3 + $0x28] sm:$0xff] %vm510, %v472
  %517 = vst.msk [vmem:[%s3 + $0x30] sm:$0xff] %vm510, %v473
  %518 = vst.msk [vmem:[%s3 + $0x38] sm:$0xff] %vm510, %v474
  %519 = vst.msk [vmem:[%s3 + $0x40] sm:$0xff] %vm510, %v475
  %520 = vst.msk [vmem:[%s3 + $0x48] sm:$0xff] %vm510, %v476
  %521 = vst.msk [vmem:[%s3 + $0x50] sm:$0xff] %vm510, %v477
  %522 = vst.msk [vmem:[%s3 + $0x58] sm:$0xff] %vm510, %v478
  %523 = vst.msk [vmem:[%s3 + $0x60] sm:$0xff] %vm510, %v479
  %524 = vst.msk [vmem:[%s3 + $0x68] sm:$0xff] %vm510, %v480
  %525 = vst.msk [vmem:[%s3 + $0x70] sm:$0xff] %vm510, %v481
  %526 = vst.msk [vmem:[%s3 + $0x78] sm:$0xff] %vm510, %v482
  %527 = vst.msk [vmem:[%s3 + $0x80] sm:$0xff] %vm510, %v483
  %528 = vst.msk [vmem:[%s3 + $0x88] sm:$0xff] %vm510, %v484
  %529 = vst.msk [vmem:[%s3 + $0x90] sm:$0xff] %vm510, %v485
  %530 = vst.msk [vmem:[%s3 + $0x98] sm:$0xff] %vm510, %v486
  %531 = vst.msk [vmem:[%s3 + $0xa0] sm:$0xff] %vm510, %v487
  %532 = vst.msk [vmem:[%s3 + $0xa8] sm:$0xff] %vm510, %v488
  %533 = vst.msk [vmem:[%s3 + $0xb0] sm:$0xff] %vm510, %v489
  %534 = vst.msk [vmem:[%s3 + $0xb8] sm:$0xff] %vm510, %v490
  %535 = vst.msk [vmem:[%s3 + $0xc0] sm:$0xff] %vm510, %v491
  %536 = vst.msk [vmem:[%s3 + $0xc8] sm:$0xff] %vm510, %v492
  %537 = vst.msk [vmem:[%s3 + $0xd0] sm:$0xff] %vm510, %v493
  %538 = vst.msk [vmem:[%s3 + $0xd8] sm:$0xff] %vm510, %v494
  %539 = vst.msk [vmem:[%s3 + $0xe0] sm:$0xff] %vm510, %v495
  %540 = vst.msk [vmem:[%s3 + $0xe8] sm:$0xff] %vm510, %v496
  %541 = vst.msk [vmem:[%s3 + $0xf0] sm:$0xff] %vm510, %v497
  %542 = vst.msk [vmem:[%s3 + $0xf8] sm:$0xff] %vm510, %v498
  %543 = vst.msk [vmem:[%s3 + $0x100] sm:$0xff] %vm510, %v499
  %544 = vst.msk [vmem:[%s3 + $0x108] sm:$0xff] %vm510, %v500
  %545 = vst.msk [vmem:[%s3 + $0x110] sm:$0xff] %vm510, %v501
  %546 = vst.msk [vmem:[%s3 + $0x118] sm:$0xff] %vm510, %v502
  %547 = vst.msk [vmem:[%s3 + $0x120] sm:$0xff] %vm510, %v503
  %548 = vst.msk [vmem:[%s3 + $0x128] sm:$0xff] %vm510, %v504
  %549 = vst.msk [vmem:[%s3 + $0x130] sm:$0xff] %vm510, %v505
  %550 = vst.msk [vmem:[%s3 + $0x138] sm:$0xff] %vm510, %v506
  %551 = vst.msk [vmem:[%s3 + $0x140] sm:$0xff] %vm510, %v507
  %552 = vst.msk [vmem:[%s3 + $0x148] sm:$0xff] %vm510, %v508
  %vm553 = vcmask 17408
  %554 = vst.msk [vmem:[%s3 + $0x150] sm:$0x3] %vm553, %v509
  // Predicated region
  $region14: #{_lambda_.9} parent=0 // pred_check
    _
  $region15: #{_lambda_.9} parent=0 // pred_check_branch
    %556 = sbr.rel (0) target = $region17
  $region16: #{_lambda_.9} parent=0 // pred_region
    _
  $region17: #{_lambda_.9} parent=0 // pred_fallthru
    _
  // Predicated region
  $region18: #{_lambda_.9} parent=0 // pred_check
    _
  $region19: #{_lambda_.9} parent=0 // pred_check_branch
    %558 = sbr.rel (0) target = $region21
  $region20: #{_lambda_.9} parent=0 // pred_region
    _
  $region21: #{_lambda_.9} parent=0 // pred_fallthru
    _

</llo_original>
